<compile_context>
chip_gen: v5e
topology: v5e:2x2
jax: 0.10.0
libtpu: 0.0.40
codegen_flags: <defaults>
</compile_context>

<pallas_src>
import functools
import math

import jax
import jax.numpy as jnp
from jax.experimental import pallas as pl
from jax.experimental.pallas import tpu as pltpu

BN_EPS = 1e-5
LEAKY_SLOPE = 0.2

_VMEM = pl.BlockSpec(memory_space=pltpu.MemorySpace.VMEM)
_ANY = pl.BlockSpec(memory_space=pl.ANY)


# ------------------------------ in-kernel math -------------------------------

def _bn_normalize(h):
    # BatchNorm1d training mode: biased batch variance over the batch axis.
    mean = jnp.mean(h, axis=0, keepdims=True)
    var = jnp.mean(jnp.square(h - mean), axis=0, keepdims=True)
    return (h - mean) * jax.lax.rsqrt(var + BN_EPS)


def _leaky_relu(h):
    # slope 0.2 < 1  =>  max(h, 0.2*h) == LeakyReLU(0.2)(h); one VALU op.
    return jnp.maximum(h, LEAKY_SLOPE * h)


def _linear_bf16(h, w_bf16, b):
    # bf16 x bf16 on the MXU, f32 accumulate, f32 bias add.
    return jnp.dot(h.astype(jnp.bfloat16), w_bf16,
                   preferred_element_type=jnp.float32) + b


# --------------------------- fused VAE forward kernel -------------------------

def make_vae_kernel(n_fc, inter_dim, in_dim, enc_segs, dec_segs):
    """Single fused kernel: encoder -> reparam -> decoder -> reparam.

    Per-net packed weights (bf16, BN affine folded in):
      W_1..W_n_fc (d_in, d_out)      trunk Linears
      W1p  (h_d, 2*latent)           [W1_mu | W1_sigma]   (heads merged)
      W2blk(2*latent, 2*out)         block-diag [W2_mu, 0; 0, W2_sigma]
    All biases of both nets live in one (1, total) f32 row (bias_ref), sliced
    at the static lane offsets in enc_segs / dec_segs.

    Output ref: (B, 3*inter_dim + in_dim) = [mu_z | sigma_z | z | x_rec].
    """
    n_w = n_fc + 2   # weight tensors per net

    def vnet(h, w_refs, bias_ref, segs):
        for li in range(n_fc):
            off, wd = segs[li]
            h = _leaky_relu(_linear_bf16(_bn_normalize(h), w_refs[li][...],
                                         bias_ref[:, off:off + wd]))
        # Head BN stats are identical for the mu/sigma heads: normalize once;
        # per-head affine + both first Linears are one matmul, both second
        # Linears one block-diagonal matmul.
        off1, wd1 = segs[n_fc]
        off2, wd2 = segs[n_fc + 1]
        m = _leaky_relu(_linear_bf16(_bn_normalize(h), w_refs[n_fc][...],
                                     bias_ref[:, off1:off1 + wd1]))
        return _linear_bf16(m, w_refs[n_fc + 1][...],
                            bias_ref[:, off2:off2 + wd2])   # (B, 2*out) = [mu|sigma]

    def kernel(*refs):
        x_ref, eps_z_ref, eps_x_ref, bias_ref = refs[:4]
        enc_w = refs[4:4 + n_w]
        dec_hbm = refs[4 + n_w:4 + 2 * n_w]
        out_ref = refs[4 + 2 * n_w]
        dec_buf = refs[5 + 2 * n_w:5 + 3 * n_w]
        sem = refs[5 + 3 * n_w]

        # Kick off the decoder-weight HBM->VMEM DMAs now; they complete while
        # the encoder half computes (hides ~half the parameter fetch time).
        copies = [pltpu.make_async_copy(dec_hbm[i], dec_buf[i], sem.at[i])
                  for i in range(n_w)]
        for c in copies:
            c.start()

        # ---- encoder + reparametrize ----
        head_z = vnet(x_ref[...], enc_w, bias_ref, enc_segs)   # [mu_z | sigma_z]
        mu_z = head_z[:, :inter_dim]
        sigma_z = head_z[:, inter_dim:]
        z = eps_z_ref[...] * jnp.exp(0.5 * sigma_z) + mu_z     # exp -> EUP

        # Direct static lane-slice stores into one lane-dense output slab.
        out_ref[:, :2 * inter_dim] = head_z
        out_ref[:, 2 * inter_dim:3 * inter_dim] = z

        # ---- decoder + reparametrize (weights prefetched above) ----
        for c in copies:
            c.wait()

        head_x = vnet(z, dec_buf, bias_ref, dec_segs)          # [mu_x | sigma_x]
        mu_x = head_x[:, :in_dim]
        sigma_x = head_x[:, in_dim:]
        out_ref[:, 3 * inter_dim:] = eps_x_ref[...] * jnp.exp(0.5 * sigma_x) + mu_x

    return kernel


# ---------------------------------- wrapper -----------------------------------

@functools.partial(jax.jit, static_argnames=("inter_dim", "in_dim"))
def vae_forward(x, eps_z, eps_x, bias_all, enc_w, dec_w, *, inter_dim, in_dim):
    B = x.shape[0]
    assert B > 1, "training-mode BatchNorm needs batch statistics (B > 1)"
    n_fc = len(enc_w) - 2
    out_width = 3 * inter_dim + in_dim

    # Static (trace-time) lane offsets of each layer's bias inside bias_all.
    def segs_from(ws, start):
        segs, off = [], start
        for w in ws:
            segs.append((off, int(w.shape[1])))
            off += int(w.shape[1])
        return tuple(segs), off

    enc_segs, off = segs_from(enc_w, 0)
    dec_segs, off = segs_from(dec_w, off)
    assert off == bias_all.shape[1]

    # Advisory cost hint (block-diagonal head matmul counted at its dense half).
    flops = sum(2 * B * w.shape[0] * w.shape[1] for w in list(enc_w) + list(dec_w))
    flops -= B * (enc_w[-1].shape[0] * enc_w[-1].shape[1]
                  + dec_w[-1].shape[0] * dec_w[-1].shape[1])
    bytes_accessed = sum(int(a.size) * a.dtype.itemsize
                         for a in (x, eps_z, eps_x, bias_all, *enc_w, *dec_w))
    bytes_accessed += 4 * B * out_width
    cost = pl.CostEstimate(
        flops=int(flops),
        transcendentals=int(B * (inter_dim + in_dim)) + 2048,  # exps + BN rsqrts (approx)
        bytes_accessed=int(bytes_accessed),
    )

    out = pl.pallas_call(
        make_vae_kernel(n_fc, inter_dim, in_dim, enc_segs, dec_segs),
        out_shape=jax.ShapeDtypeStruct((B, out_width), jnp.float32),
        in_specs=[_VMEM] * (4 + len(enc_w)) + [_ANY] * len(dec_w),
        out_specs=_VMEM,
        scratch_shapes=[pltpu.VMEM(tuple(w.shape), jnp.bfloat16) for w in dec_w]
                       + [pltpu.SemaphoreType.DMA((len(dec_w),))],
        cost_estimate=cost,
    )(x, eps_z, eps_x, bias_all, *enc_w, *dec_w)

    mu_z = out[:, :inter_dim]
    sigma_z = out[:, inter_dim:2 * inter_dim]
    z = out[:, 2 * inter_dim:3 * inter_dim]
    x_rec = out[:, 3 * inter_dim:]
    return mu_z, sigma_z, z, x_rec


# --------------------------- parameters (host side) ---------------------------

def _init_linear(key, in_d, out_d):
    k1, k2 = jax.random.split(key)
    s = 1.0 / math.sqrt(in_d)
    w = jax.random.uniform(k1, (in_d, out_d), jnp.float32, -s, s)   # (in,out): W^T
    b = jax.random.uniform(k2, (1, out_d), jnp.float32, -s, s)
    return w, b


def _init_bn(d):
    return jnp.ones((1, d), jnp.float32), jnp.zeros((1, d), jnp.float32)


def init_vnet_raw(key, in_dim, latent_dims, out_dim):
    """Matches VEncoder/VDecoder(in_dim, latent_dims, out_dim) structure."""
    dims = [in_dim] + list(latent_dims)
    trunk = []
    for i in range(1, len(dims) - 1):
        key, sk = jax.random.split(key)
        g, be = _init_bn(dims[i - 1])
        w, b = _init_linear(sk, dims[i - 1], dims[i])
        trunk.append((g, be, w, b))
    h_d, l_d = dims[-2], dims[-1]
    heads = []
    for _ in range(2):                       # mu head, then sigma head
        key, k1, k2 = jax.random.split(key, 3)
        g, be = _init_bn(h_d)
        w1, b1 = _init_linear(k1, h_d, l_d)
        w2, b2 = _init_linear(k2, l_d, out_dim)
        heads.append((g, be, w1, b1, w2, b2))
    return trunk, tuple(heads)


def pack_vnet(trunk, heads):
    """Fold every BN affine into the following Linear, merge the mu/sigma heads
    (W1 concat, block-diagonal W2), cast weights to bf16, collect f32 biases.
    Done once at init on the host, never in-kernel."""
    ws, bs = [], []
    for g, be, w, b in trunk:
        ws.append((g.T * w).astype(jnp.bfloat16))
        bs.append(be @ w + b)
    (g_m, be_m, w1_m, b1_m, w2_m, b2_m), (g_s, be_s, w1_s, b1_s, w2_s, b2_s) = heads
    w1p = jnp.concatenate([g_m.T * w1_m, g_s.T * w1_s], axis=1)
    b1p = jnp.concatenate([be_m @ w1_m + b1_m, be_s @ w1_s + b1_s], axis=1)
    l_d, o_d = w2_m.shape
    w2blk = jnp.zeros((2 * l_d, 2 * o_d), jnp.float32)
    w2blk = w2blk.at[:l_d, :o_d].set(w2_m).at[l_d:, o_d:].set(w2_s)
    b2p = jnp.concatenate([b2_m, b2_s], axis=1)
    ws += [w1p.astype(jnp.bfloat16), w2blk.astype(jnp.bfloat16)]
    bs += [b1p, b2p]
    return ws, bs


# --------------------------- pure-JAX reference check --------------------------
# Unfused, unpacked reference of the module that mirrors the kernel's bf16
# weight/activation feed (f32 accumulate), so the assert isolates the fusion /
# folding / head-merging / bias-packing / DMA logic. (Fresh-module gamma=1,
# beta=0 makes the folded and unfolded parameterizations numerically identical.)

def _ref_bn(h, g, be):
    mean = jnp.mean(h, axis=0, keepdims=True)
    var = jnp.mean(jnp.square(h - mean), axis=0, keepdims=True)
    return (h - mean) * jax.lax.rsqrt(var + BN_EPS) * g + be


def _ref_lrelu(h):
    return jnp.where(h >= 0, h, LEAKY_SLOPE * h)


def _ref_qdot(h, w, b):
    hq = h.astype(jnp.bfloat16).astype(jnp.float32)
    wq = w.astype(jnp.bfloat16).astype(jnp.float32)
    return jnp.dot(hq, wq, precision=jax.lax.Precision.HIGHEST,
                   preferred_element_type=jnp.float32) + b


def ref_vnet(x, trunk, heads):
    h = x
    for g, be, w, b in trunk:
        h = _ref_lrelu(_ref_qdot(_ref_bn(h, g, be), w, b))
    outs = []
    for g, be, w1, b1, w2, b2 in heads:
        m = _ref_lrelu(_ref_qdot(_ref_bn(h, g, be), w1, b1))
        outs.append(_ref_qdot(m, w2, b2))
    return outs[0], outs[1]


def ref_vae_forward(x, eps_z, eps_x, enc_trunk, enc_heads, dec_trunk, dec_heads):
    mu_z, sigma_z = ref_vnet(x, enc_trunk, enc_heads)
    z = eps_z * jnp.exp(0.5 * sigma_z) + mu_z
    mu_x, sigma_x = ref_vnet(z, dec_trunk, dec_heads)
    x_rec = eps_x * jnp.exp(0.5 * sigma_x) + mu_x
    return mu_z, sigma_z, z, x_rec


# ------------------------------------ main ------------------------------------

if __name__ == "__main__":
    B, in_dim, inter_dim = 8, 16, 8

    root = jax.random.PRNGKey(0)
    k_enc, k_dec, k_x, k_nz, k_nx = jax.random.split(root, 5)

    # VariationalAutoEncoder(in_dim, inter_dim)
    enc_trunk, enc_heads = init_vnet_raw(k_enc, in_dim, [32, 128, 256, 256, 64], inter_dim)
    dec_trunk, dec_heads = init_vnet_raw(k_dec, inter_dim, [64, 256, 256, 128, 32], in_dim)
    enc_w, enc_bs = pack_vnet(enc_trunk, enc_heads)
    dec_w, dec_bs = pack_vnet(dec_trunk, dec_heads)
    bias_all = jnp.concatenate(enc_bs + dec_bs, axis=1)   # (1, 1616) f32, one DMA

    x = jax.random.normal(k_x, (B, in_dim), jnp.float32)
    # torch.randn noise for the two reparametrize() calls, generated host-side.
    eps_z = jax.random.normal(k_nz, (B, inter_dim), jnp.float32)
    eps_x = jax.random.normal(k_nx, (B, in_dim), jnp.float32)

    mu_z, sigma_z, z, x_rec = vae_forward(
        x, eps_z, eps_x, bias_all, tuple(enc_w), tuple(dec_w),
        inter_dim=inter_dim, in_dim=in_dim)
    jax.block_until_ready((mu_z, sigma_z, z, x_rec))

    assert mu_z.shape == (B, inter_dim) and sigma_z.shape == (B, inter_dim)
    assert z.shape == (B, inter_dim) and x_rec.shape == (B, in_dim)
    assert all(bool(jnp.all(jnp.isfinite(a))) for a in (mu_z, sigma_z, z, x_rec))

    # Correctness guard against the unfused, unpacked reference.
    refs = ref_vae_forward(x, eps_z, eps_x, enc_trunk, enc_heads, dec_trunk, dec_heads)
    for got, want in zip((mu_z, sigma_z, z, x_rec), refs):
        assert jnp.allclose(got, want, rtol=1e-2, atol=1e-2), \
            float(jnp.max(jnp.abs(got - want)))

    print("KERNEL_OK")
</pallas_src>

<mosaic_0001>
module attributes {stable_mosaic.version = 11 : i64} {
  func.func @kernel(%arg0: memref<8x16xf32, #tpu.memory_space<vmem>>, %arg1: memref<8x8xf32, #tpu.memory_space<vmem>>, %arg2: memref<8x16xf32, #tpu.memory_space<vmem>>, %arg3: memref<1x1616xf32, #tpu.memory_space<vmem>>, %arg4: memref<16x32xbf16, #tpu.memory_space<vmem>>, %arg5: memref<32x128xbf16, #tpu.memory_space<vmem>>, %arg6: memref<128x256xbf16, #tpu.memory_space<vmem>>, %arg7: memref<256x256xbf16, #tpu.memory_space<vmem>>, %arg8: memref<256x128xbf16, #tpu.memory_space<vmem>>, %arg9: memref<128x16xbf16, #tpu.memory_space<vmem>>, %arg10: memref<8x64xbf16, #tpu.memory_space<any>>, %arg11: memref<64x256xbf16, #tpu.memory_space<any>>, %arg12: memref<256x256xbf16, #tpu.memory_space<any>>, %arg13: memref<256x128xbf16, #tpu.memory_space<any>>, %arg14: memref<128x64xbf16, #tpu.memory_space<any>>, %arg15: memref<64x32xbf16, #tpu.memory_space<any>>, %arg16: memref<8x40xf32, #tpu.memory_space<vmem>>, %arg17: memref<8x64xbf16, #tpu.memory_space<vmem>>, %arg18: memref<64x256xbf16, #tpu.memory_space<vmem>>, %arg19: memref<256x256xbf16, #tpu.memory_space<vmem>>, %arg20: memref<256x128xbf16, #tpu.memory_space<vmem>>, %arg21: memref<128x64xbf16, #tpu.memory_space<vmem>>, %arg22: memref<64x32xbf16, #tpu.memory_space<vmem>>, %arg23: memref<6x!tpu.dma_semaphore, #tpu.memory_space<semaphore_mem>>) attributes {dimension_semantics = [], scalar_prefetch = 0 : i64, scratch_operands = 7 : i64, tpu.core_type = #tpu.core_type<tc>} {
    %c0_i32 = arith.constant 0 : i32
    %0 = tpu.memref_slice %arg23[%c0_i32] : memref<6x!tpu.dma_semaphore, #tpu.memory_space<semaphore_mem>> -> memref<1x!tpu.dma_semaphore, #tpu.memory_space<semaphore_mem>>
    %1 = tpu.memref_squeeze %0 : memref<1x!tpu.dma_semaphore, #tpu.memory_space<semaphore_mem>> -> memref<!tpu.dma_semaphore, #tpu.memory_space<semaphore_mem>>
    tpu.enqueue_dma source(%arg10 : memref<8x64xbf16, #tpu.memory_space<any>>) target(%arg17 : memref<8x64xbf16, #tpu.memory_space<vmem>>) target_semaphore(%1 : memref<!tpu.dma_semaphore, #tpu.memory_space<semaphore_mem>>)
    %c1_i32 = arith.constant 1 : i32
    %2 = tpu.memref_slice %arg23[%c1_i32] : memref<6x!tpu.dma_semaphore, #tpu.memory_space<semaphore_mem>> -> memref<1x!tpu.dma_semaphore, #tpu.memory_space<semaphore_mem>>
    %3 = tpu.memref_squeeze %2 : memref<1x!tpu.dma_semaphore, #tpu.memory_space<semaphore_mem>> -> memref<!tpu.dma_semaphore, #tpu.memory_space<semaphore_mem>>
    tpu.enqueue_dma source(%arg11 : memref<64x256xbf16, #tpu.memory_space<any>>) target(%arg18 : memref<64x256xbf16, #tpu.memory_space<vmem>>) target_semaphore(%3 : memref<!tpu.dma_semaphore, #tpu.memory_space<semaphore_mem>>)
    %c2_i32 = arith.constant 2 : i32
    %4 = tpu.memref_slice %arg23[%c2_i32] : memref<6x!tpu.dma_semaphore, #tpu.memory_space<semaphore_mem>> -> memref<1x!tpu.dma_semaphore, #tpu.memory_space<semaphore_mem>>
    %5 = tpu.memref_squeeze %4 : memref<1x!tpu.dma_semaphore, #tpu.memory_space<semaphore_mem>> -> memref<!tpu.dma_semaphore, #tpu.memory_space<semaphore_mem>>
    tpu.enqueue_dma source(%arg12 : memref<256x256xbf16, #tpu.memory_space<any>>) target(%arg19 : memref<256x256xbf16, #tpu.memory_space<vmem>>) target_semaphore(%5 : memref<!tpu.dma_semaphore, #tpu.memory_space<semaphore_mem>>)
    %c3_i32 = arith.constant 3 : i32
    %6 = tpu.memref_slice %arg23[%c3_i32] : memref<6x!tpu.dma_semaphore, #tpu.memory_space<semaphore_mem>> -> memref<1x!tpu.dma_semaphore, #tpu.memory_space<semaphore_mem>>
    %7 = tpu.memref_squeeze %6 : memref<1x!tpu.dma_semaphore, #tpu.memory_space<semaphore_mem>> -> memref<!tpu.dma_semaphore, #tpu.memory_space<semaphore_mem>>
    tpu.enqueue_dma source(%arg13 : memref<256x128xbf16, #tpu.memory_space<any>>) target(%arg20 : memref<256x128xbf16, #tpu.memory_space<vmem>>) target_semaphore(%7 : memref<!tpu.dma_semaphore, #tpu.memory_space<semaphore_mem>>)
    %c4_i32 = arith.constant 4 : i32
    %8 = tpu.memref_slice %arg23[%c4_i32] : memref<6x!tpu.dma_semaphore, #tpu.memory_space<semaphore_mem>> -> memref<1x!tpu.dma_semaphore, #tpu.memory_space<semaphore_mem>>
    %9 = tpu.memref_squeeze %8 : memref<1x!tpu.dma_semaphore, #tpu.memory_space<semaphore_mem>> -> memref<!tpu.dma_semaphore, #tpu.memory_space<semaphore_mem>>
    tpu.enqueue_dma source(%arg14 : memref<128x64xbf16, #tpu.memory_space<any>>) target(%arg21 : memref<128x64xbf16, #tpu.memory_space<vmem>>) target_semaphore(%9 : memref<!tpu.dma_semaphore, #tpu.memory_space<semaphore_mem>>)
    %c5_i32 = arith.constant 5 : i32
    %10 = tpu.memref_slice %arg23[%c5_i32] : memref<6x!tpu.dma_semaphore, #tpu.memory_space<semaphore_mem>> -> memref<1x!tpu.dma_semaphore, #tpu.memory_space<semaphore_mem>>
    %11 = tpu.memref_squeeze %10 : memref<1x!tpu.dma_semaphore, #tpu.memory_space<semaphore_mem>> -> memref<!tpu.dma_semaphore, #tpu.memory_space<semaphore_mem>>
    tpu.enqueue_dma source(%arg15 : memref<64x32xbf16, #tpu.memory_space<any>>) target(%arg22 : memref<64x32xbf16, #tpu.memory_space<vmem>>) target_semaphore(%11 : memref<!tpu.dma_semaphore, #tpu.memory_space<semaphore_mem>>)
    %c0 = arith.constant 0 : index
    %c0_0 = arith.constant 0 : index
    %12 = vector.load %arg0[%c0, %c0_0] : memref<8x16xf32, #tpu.memory_space<vmem>>, vector<8x16xf32>
    %cst = arith.constant dense<0.000000e+00> : vector<16xf32>
    %13 = vector.multi_reduction <add>, %12, %cst [0] : vector<8x16xf32> to vector<16xf32>
    %14 = vector.shape_cast %13 : vector<16xf32> to vector<1x16xf32>
    %cst_1 = arith.constant 8.000000e+00 : f32
    %15 = vector.broadcast %cst_1 : f32 to vector<1x16xf32>
    %16 = arith.divf %14, %15 : vector<1x16xf32>
    %17 = vector.broadcast %16 : vector<1x16xf32> to vector<8x16xf32>
    %18 = arith.subf %12, %17 : vector<8x16xf32>
    %19 = arith.mulf %18, %18 : vector<8x16xf32>
    %cst_2 = arith.constant dense<0.000000e+00> : vector<16xf32>
    %20 = vector.multi_reduction <add>, %19, %cst_2 [0] : vector<8x16xf32> to vector<16xf32>
    %21 = vector.shape_cast %20 : vector<16xf32> to vector<1x16xf32>
    %cst_3 = arith.constant 8.000000e+00 : f32
    %22 = vector.broadcast %cst_3 : f32 to vector<1x16xf32>
    %23 = arith.divf %21, %22 : vector<1x16xf32>
    %24 = vector.broadcast %16 : vector<1x16xf32> to vector<8x16xf32>
    %25 = arith.subf %12, %24 : vector<8x16xf32>
    %cst_4 = arith.constant 9.99999974E-6 : f32
    %26 = vector.broadcast %cst_4 : f32 to vector<1x16xf32>
    %27 = arith.addf %23, %26 : vector<1x16xf32>
    %28 = math.rsqrt %27 : vector<1x16xf32>
    %29 = vector.broadcast %28 : vector<1x16xf32> to vector<8x16xf32>
    %30 = arith.mulf %25, %29 : vector<8x16xf32>
    %c0_5 = arith.constant 0 : index
    %c0_6 = arith.constant 0 : index
    %31 = vector.load %arg4[%c0_5, %c0_6] : memref<16x32xbf16, #tpu.memory_space<vmem>>, vector<16x32xbf16>
    %c0_7 = arith.constant 0 : index
    %c0_8 = arith.constant 0 : index
    %32 = vector.load %arg3[%c0_7, %c0_8] : memref<1x1616xf32, #tpu.memory_space<vmem>>, vector<1x32xf32>
    %33 = arith.truncf %30 : vector<8x16xf32> to vector<8x16xbf16>
    %cst_9 = arith.constant dense<0.000000e+00> : vector<8x32xf32>
    %34 = tpu.matmul %33, %31, %cst_9 {dimension_numbers = #tpu.dot_dimension_numbers<[1], [0], [0], [1], [0, 0, 1, 1], [], []>} : vector<8x16xbf16>, vector<16x32xbf16>, vector<8x32xf32> -> vector<8x32xf32>
    %35 = vector.broadcast %32 : vector<1x32xf32> to vector<8x32xf32>
    %36 = arith.addf %34, %35 : vector<8x32xf32>
    %cst_10 = arith.constant 2.000000e-01 : f32
    %37 = vector.broadcast %cst_10 : f32 to vector<8x32xf32>
    %38 = arith.mulf %37, %36 : vector<8x32xf32>
    %39 = arith.maximumf %36, %38 : vector<8x32xf32>
    %cst_11 = arith.constant dense<0.000000e+00> : vector<32xf32>
    %40 = vector.multi_reduction <add>, %39, %cst_11 [0] : vector<8x32xf32> to vector<32xf32>
    %41 = vector.shape_cast %40 : vector<32xf32> to vector<1x32xf32>
    %cst_12 = arith.constant 8.000000e+00 : f32
    %42 = vector.broadcast %cst_12 : f32 to vector<1x32xf32>
    %43 = arith.divf %41, %42 : vector<1x32xf32>
    %44 = vector.broadcast %43 : vector<1x32xf32> to vector<8x32xf32>
    %45 = arith.subf %39, %44 : vector<8x32xf32>
    %46 = arith.mulf %45, %45 : vector<8x32xf32>
    %cst_13 = arith.constant dense<0.000000e+00> : vector<32xf32>
    %47 = vector.multi_reduction <add>, %46, %cst_13 [0] : vector<8x32xf32> to vector<32xf32>
    %48 = vector.shape_cast %47 : vector<32xf32> to vector<1x32xf32>
    %cst_14 = arith.constant 8.000000e+00 : f32
    %49 = vector.broadcast %cst_14 : f32 to vector<1x32xf32>
    %50 = arith.divf %48, %49 : vector<1x32xf32>
    %51 = vector.broadcast %43 : vector<1x32xf32> to vector<8x32xf32>
    %52 = arith.subf %39, %51 : vector<8x32xf32>
    %cst_15 = arith.constant 9.99999974E-6 : f32
    %53 = vector.broadcast %cst_15 : f32 to vector<1x32xf32>
    %54 = arith.addf %50, %53 : vector<1x32xf32>
    %55 = math.rsqrt %54 : vector<1x32xf32>
    %56 = vector.broadcast %55 : vector<1x32xf32> to vector<8x32xf32>
    %57 = arith.mulf %52, %56 : vector<8x32xf32>
    %c0_16 = arith.constant 0 : index
    %c0_17 = arith.constant 0 : index
    %58 = vector.load %arg5[%c0_16, %c0_17] : memref<32x128xbf16, #tpu.memory_space<vmem>>, vector<32x128xbf16>
    %c0_18 = arith.constant 0 : index
    %c32 = arith.constant 32 : index
    %59 = vector.load %arg3[%c0_18, %c32] : memref<1x1616xf32, #tpu.memory_space<vmem>>, vector<1x128xf32>
    %60 = arith.truncf %57 : vector<8x32xf32> to vector<8x32xbf16>
    %cst_19 = arith.constant dense<0.000000e+00> : vector<8x128xf32>
    %61 = tpu.matmul %60, %58, %cst_19 {dimension_numbers = #tpu.dot_dimension_numbers<[1], [0], [0], [1], [0, 0, 1, 1], [], []>} : vector<8x32xbf16>, vector<32x128xbf16>, vector<8x128xf32> -> vector<8x128xf32>
    %62 = vector.broadcast %59 : vector<1x128xf32> to vector<8x128xf32>
    %63 = arith.addf %61, %62 : vector<8x128xf32>
    %cst_20 = arith.constant 2.000000e-01 : f32
    %64 = vector.broadcast %cst_20 : f32 to vector<8x128xf32>
    %65 = arith.mulf %64, %63 : vector<8x128xf32>
    %66 = arith.maximumf %63, %65 : vector<8x128xf32>
    %cst_21 = arith.constant dense<0.000000e+00> : vector<128xf32>
    %67 = vector.multi_reduction <add>, %66, %cst_21 [0] : vector<8x128xf32> to vector<128xf32>
    %68 = vector.shape_cast %67 : vector<128xf32> to vector<1x128xf32>
    %cst_22 = arith.constant 8.000000e+00 : f32
    %69 = vector.broadcast %cst_22 : f32 to vector<1x128xf32>
    %70 = arith.divf %68, %69 : vector<1x128xf32>
    %71 = vector.broadcast %70 : vector<1x128xf32> to vector<8x128xf32>
    %72 = arith.subf %66, %71 : vector<8x128xf32>
    %73 = arith.mulf %72, %72 : vector<8x128xf32>
    %cst_23 = arith.constant dense<0.000000e+00> : vector<128xf32>
    %74 = vector.multi_reduction <add>, %73, %cst_23 [0] : vector<8x128xf32> to vector<128xf32>
    %75 = vector.shape_cast %74 : vector<128xf32> to vector<1x128xf32>
    %cst_24 = arith.constant 8.000000e+00 : f32
    %76 = vector.broadcast %cst_24 : f32 to vector<1x128xf32>
    %77 = arith.divf %75, %76 : vector<1x128xf32>
    %78 = vector.broadcast %70 : vector<1x128xf32> to vector<8x128xf32>
    %79 = arith.subf %66, %78 : vector<8x128xf32>
    %cst_25 = arith.constant 9.99999974E-6 : f32
    %80 = vector.broadcast %cst_25 : f32 to vector<1x128xf32>
    %81 = arith.addf %77, %80 : vector<1x128xf32>
    %82 = math.rsqrt %81 : vector<1x128xf32>
    %83 = vector.broadcast %82 : vector<1x128xf32> to vector<8x128xf32>
    %84 = arith.mulf %79, %83 : vector<8x128xf32>
    %c0_26 = arith.constant 0 : index
    %c0_27 = arith.constant 0 : index
    %85 = vector.load %arg6[%c0_26, %c0_27] : memref<128x256xbf16, #tpu.memory_space<vmem>>, vector<128x256xbf16>
    %c0_28 = arith.constant 0 : index
    %c160 = arith.constant 160 : index
    %86 = vector.load %arg3[%c0_28, %c160] : memref<1x1616xf32, #tpu.memory_space<vmem>>, vector<1x256xf32>
    %87 = arith.truncf %84 : vector<8x128xf32> to vector<8x128xbf16>
    %cst_29 = arith.constant dense<0.000000e+00> : vector<8x256xf32>
    %88 = tpu.matmul %87, %85, %cst_29 {dimension_numbers = #tpu.dot_dimension_numbers<[1], [0], [0], [1], [0, 0, 1, 1], [], []>} : vector<8x128xbf16>, vector<128x256xbf16>, vector<8x256xf32> -> vector<8x256xf32>
    %89 = vector.broadcast %86 : vector<1x256xf32> to vector<8x256xf32>
    %90 = arith.addf %88, %89 : vector<8x256xf32>
    %cst_30 = arith.constant 2.000000e-01 : f32
    %91 = vector.broadcast %cst_30 : f32 to vector<8x256xf32>
    %92 = arith.mulf %91, %90 : vector<8x256xf32>
    %93 = arith.maximumf %90, %92 : vector<8x256xf32>
    %cst_31 = arith.constant dense<0.000000e+00> : vector<256xf32>
    %94 = vector.multi_reduction <add>, %93, %cst_31 [0] : vector<8x256xf32> to vector<256xf32>
    %95 = vector.shape_cast %94 : vector<256xf32> to vector<1x256xf32>
    %cst_32 = arith.constant 8.000000e+00 : f32
    %96 = vector.broadcast %cst_32 : f32 to vector<1x256xf32>
    %97 = arith.divf %95, %96 : vector<1x256xf32>
    %98 = vector.broadcast %97 : vector<1x256xf32> to vector<8x256xf32>
    %99 = arith.subf %93, %98 : vector<8x256xf32>
    %100 = arith.mulf %99, %99 : vector<8x256xf32>
    %cst_33 = arith.constant dense<0.000000e+00> : vector<256xf32>
    %101 = vector.multi_reduction <add>, %100, %cst_33 [0] : vector<8x256xf32> to vector<256xf32>
    %102 = vector.shape_cast %101 : vector<256xf32> to vector<1x256xf32>
    %cst_34 = arith.constant 8.000000e+00 : f32
    %103 = vector.broadcast %cst_34 : f32 to vector<1x256xf32>
    %104 = arith.divf %102, %103 : vector<1x256xf32>
    %105 = vector.broadcast %97 : vector<1x256xf32> to vector<8x256xf32>
    %106 = arith.subf %93, %105 : vector<8x256xf32>
    %cst_35 = arith.constant 9.99999974E-6 : f32
    %107 = vector.broadcast %cst_35 : f32 to vector<1x256xf32>
    %108 = arith.addf %104, %107 : vector<1x256xf32>
    %109 = math.rsqrt %108 : vector<1x256xf32>
    %110 = vector.broadcast %109 : vector<1x256xf32> to vector<8x256xf32>
    %111 = arith.mulf %106, %110 : vector<8x256xf32>
    %c0_36 = arith.constant 0 : index
    %c0_37 = arith.constant 0 : index
    %112 = vector.load %arg7[%c0_36, %c0_37] : memref<256x256xbf16, #tpu.memory_space<vmem>>, vector<256x256xbf16>
    %c0_38 = arith.constant 0 : index
    %c416 = arith.constant 416 : index
    %113 = vector.load %arg3[%c0_38, %c416] : memref<1x1616xf32, #tpu.memory_space<vmem>>, vector<1x256xf32>
    %114 = arith.truncf %111 : vector<8x256xf32> to vector<8x256xbf16>
    %cst_39 = arith.constant dense<0.000000e+00> : vector<8x256xf32>
    %115 = tpu.matmul %114, %112, %cst_39 {dimension_numbers = #tpu.dot_dimension_numbers<[1], [0], [0], [1], [0, 0, 1, 1], [], []>} : vector<8x256xbf16>, vector<256x256xbf16>, vector<8x256xf32> -> vector<8x256xf32>
    %116 = vector.broadcast %113 : vector<1x256xf32> to vector<8x256xf32>
    %117 = arith.addf %115, %116 : vector<8x256xf32>
    %cst_40 = arith.constant 2.000000e-01 : f32
    %118 = vector.broadcast %cst_40 : f32 to vector<8x256xf32>
    %119 = arith.mulf %118, %117 : vector<8x256xf32>
    %120 = arith.maximumf %117, %119 : vector<8x256xf32>
    %cst_41 = arith.constant dense<0.000000e+00> : vector<256xf32>
    %121 = vector.multi_reduction <add>, %120, %cst_41 [0] : vector<8x256xf32> to vector<256xf32>
    %122 = vector.shape_cast %121 : vector<256xf32> to vector<1x256xf32>
    %cst_42 = arith.constant 8.000000e+00 : f32
    %123 = vector.broadcast %cst_42 : f32 to vector<1x256xf32>
    %124 = arith.divf %122, %123 : vector<1x256xf32>
    %125 = vector.broadcast %124 : vector<1x256xf32> to vector<8x256xf32>
    %126 = arith.subf %120, %125 : vector<8x256xf32>
    %127 = arith.mulf %126, %126 : vector<8x256xf32>
    %cst_43 = arith.constant dense<0.000000e+00> : vector<256xf32>
    %128 = vector.multi_reduction <add>, %127, %cst_43 [0] : vector<8x256xf32> to vector<256xf32>
    %129 = vector.shape_cast %128 : vector<256xf32> to vector<1x256xf32>
    %cst_44 = arith.constant 8.000000e+00 : f32
    %130 = vector.broadcast %cst_44 : f32 to vector<1x256xf32>
    %131 = arith.divf %129, %130 : vector<1x256xf32>
    %132 = vector.broadcast %124 : vector<1x256xf32> to vector<8x256xf32>
    %133 = arith.subf %120, %132 : vector<8x256xf32>
    %cst_45 = arith.constant 9.99999974E-6 : f32
    %134 = vector.broadcast %cst_45 : f32 to vector<1x256xf32>
    %135 = arith.addf %131, %134 : vector<1x256xf32>
    %136 = math.rsqrt %135 : vector<1x256xf32>
    %137 = vector.broadcast %136 : vector<1x256xf32> to vector<8x256xf32>
    %138 = arith.mulf %133, %137 : vector<8x256xf32>
    %c0_46 = arith.constant 0 : index
    %c0_47 = arith.constant 0 : index
    %139 = vector.load %arg8[%c0_46, %c0_47] : memref<256x128xbf16, #tpu.memory_space<vmem>>, vector<256x128xbf16>
    %c0_48 = arith.constant 0 : index
    %c672 = arith.constant 672 : index
    %140 = vector.load %arg3[%c0_48, %c672] : memref<1x1616xf32, #tpu.memory_space<vmem>>, vector<1x128xf32>
    %141 = arith.truncf %138 : vector<8x256xf32> to vector<8x256xbf16>
    %cst_49 = arith.constant dense<0.000000e+00> : vector<8x128xf32>
    %142 = tpu.matmul %141, %139, %cst_49 {dimension_numbers = #tpu.dot_dimension_numbers<[1], [0], [0], [1], [0, 0, 1, 1], [], []>} : vector<8x256xbf16>, vector<256x128xbf16>, vector<8x128xf32> -> vector<8x128xf32>
    %143 = vector.broadcast %140 : vector<1x128xf32> to vector<8x128xf32>
    %144 = arith.addf %142, %143 : vector<8x128xf32>
    %cst_50 = arith.constant 2.000000e-01 : f32
    %145 = vector.broadcast %cst_50 : f32 to vector<8x128xf32>
    %146 = arith.mulf %145, %144 : vector<8x128xf32>
    %147 = arith.maximumf %144, %146 : vector<8x128xf32>
    %c0_51 = arith.constant 0 : index
    %c0_52 = arith.constant 0 : index
    %148 = vector.load %arg9[%c0_51, %c0_52] : memref<128x16xbf16, #tpu.memory_space<vmem>>, vector<128x16xbf16>
    %c0_53 = arith.constant 0 : index
    %c800 = arith.constant 800 : index
    %149 = vector.load %arg3[%c0_53, %c800] : memref<1x1616xf32, #tpu.memory_space<vmem>>, vector<1x16xf32>
    %150 = arith.truncf %147 : vector<8x128xf32> to vector<8x128xbf16>
    %cst_54 = arith.constant dense<0.000000e+00> : vector<8x16xf32>
    %151 = tpu.matmul %150, %148, %cst_54 {dimension_numbers = #tpu.dot_dimension_numbers<[1], [0], [0], [1], [0, 0, 1, 1], [], []>} : vector<8x128xbf16>, vector<128x16xbf16>, vector<8x16xf32> -> vector<8x16xf32>
    %152 = vector.broadcast %149 : vector<1x16xf32> to vector<8x16xf32>
    %153 = arith.addf %151, %152 : vector<8x16xf32>
    %154 = vector.extract_strided_slice %153 {offsets = [0, 0], sizes = [8, 8], strides = [1, 1]} : vector<8x16xf32> to vector<8x8xf32>
    %155 = vector.extract_strided_slice %153 {offsets = [0, 8], sizes = [8, 8], strides = [1, 1]} : vector<8x16xf32> to vector<8x8xf32>
    %c0_55 = arith.constant 0 : index
    %c0_56 = arith.constant 0 : index
    %156 = vector.load %arg1[%c0_55, %c0_56] : memref<8x8xf32, #tpu.memory_space<vmem>>, vector<8x8xf32>
    %cst_57 = arith.constant 5.000000e-01 : f32
    %157 = vector.broadcast %cst_57 : f32 to vector<8x8xf32>
    %158 = arith.mulf %157, %155 : vector<8x8xf32>
    %159 = math.exp %158 : vector<8x8xf32>
    %160 = arith.mulf %156, %159 : vector<8x8xf32>
    %161 = arith.addf %160, %154 : vector<8x8xf32>
    %c0_58 = arith.constant 0 : index
    %c0_59 = arith.constant 0 : index
    %162 = vector.load %arg16[%c0_58, %c0_59] : memref<8x40xf32, #tpu.memory_space<vmem>>, vector<8x16xf32>
    tpu.vector_store %arg16[%c0_58, %c0_59], %153 {strides = array<i32>} : memref<8x40xf32, #tpu.memory_space<vmem>>, vector<8x16xf32>,
    %c0_60 = arith.constant 0 : index
    %c16 = arith.constant 16 : index
    %163 = vector.load %arg16[%c0_60, %c16] : memref<8x40xf32, #tpu.memory_space<vmem>>, vector<8x8xf32>
    tpu.vector_store %arg16[%c0_60, %c16], %161 {strides = array<i32>} : memref<8x40xf32, #tpu.memory_space<vmem>>, vector<8x8xf32>,
    %c0_i32_61 = arith.constant 0 : i32
    %164 = tpu.memref_slice %arg23[%c0_i32_61] : memref<6x!tpu.dma_semaphore, #tpu.memory_space<semaphore_mem>> -> memref<1x!tpu.dma_semaphore, #tpu.memory_space<semaphore_mem>>
    %165 = tpu.memref_squeeze %164 : memref<1x!tpu.dma_semaphore, #tpu.memory_space<semaphore_mem>> -> memref<!tpu.dma_semaphore, #tpu.memory_space<semaphore_mem>>
    tpu.wait_dma2 semaphore(%165 : memref<!tpu.dma_semaphore, #tpu.memory_space<semaphore_mem>>) src(%arg10 : memref<8x64xbf16, #tpu.memory_space<any>>) dst(%arg17 : memref<8x64xbf16, #tpu.memory_space<vmem>>)
    %c1_i32_62 = arith.constant 1 : i32
    %166 = tpu.memref_slice %arg23[%c1_i32_62] : memref<6x!tpu.dma_semaphore, #tpu.memory_space<semaphore_mem>> -> memref<1x!tpu.dma_semaphore, #tpu.memory_space<semaphore_mem>>
    %167 = tpu.memref_squeeze %166 : memref<1x!tpu.dma_semaphore, #tpu.memory_space<semaphore_mem>> -> memref<!tpu.dma_semaphore, #tpu.memory_space<semaphore_mem>>
    tpu.wait_dma2 semaphore(%167 : memref<!tpu.dma_semaphore, #tpu.memory_space<semaphore_mem>>) src(%arg11 : memref<64x256xbf16, #tpu.memory_space<any>>) dst(%arg18 : memref<64x256xbf16, #tpu.memory_space<vmem>>)
    %c2_i32_63 = arith.constant 2 : i32
    %168 = tpu.memref_slice %arg23[%c2_i32_63] : memref<6x!tpu.dma_semaphore, #tpu.memory_space<semaphore_mem>> -> memref<1x!tpu.dma_semaphore, #tpu.memory_space<semaphore_mem>>
    %169 = tpu.memref_squeeze %168 : memref<1x!tpu.dma_semaphore, #tpu.memory_space<semaphore_mem>> -> memref<!tpu.dma_semaphore, #tpu.memory_space<semaphore_mem>>
    tpu.wait_dma2 semaphore(%169 : memref<!tpu.dma_semaphore, #tpu.memory_space<semaphore_mem>>) src(%arg12 : memref<256x256xbf16, #tpu.memory_space<any>>) dst(%arg19 : memref<256x256xbf16, #tpu.memory_space<vmem>>)
    %c3_i32_64 = arith.constant 3 : i32
    %170 = tpu.memref_slice %arg23[%c3_i32_64] : memref<6x!tpu.dma_semaphore, #tpu.memory_space<semaphore_mem>> -> memref<1x!tpu.dma_semaphore, #tpu.memory_space<semaphore_mem>>
    %171 = tpu.memref_squeeze %170 : memref<1x!tpu.dma_semaphore, #tpu.memory_space<semaphore_mem>> -> memref<!tpu.dma_semaphore, #tpu.memory_space<semaphore_mem>>
    tpu.wait_dma2 semaphore(%171 : memref<!tpu.dma_semaphore, #tpu.memory_space<semaphore_mem>>) src(%arg13 : memref<256x128xbf16, #tpu.memory_space<any>>) dst(%arg20 : memref<256x128xbf16, #tpu.memory_space<vmem>>)
    %c4_i32_65 = arith.constant 4 : i32
    %172 = tpu.memref_slice %arg23[%c4_i32_65] : memref<6x!tpu.dma_semaphore, #tpu.memory_space<semaphore_mem>> -> memref<1x!tpu.dma_semaphore, #tpu.memory_space<semaphore_mem>>
    %173 = tpu.memref_squeeze %172 : memref<1x!tpu.dma_semaphore, #tpu.memory_space<semaphore_mem>> -> memref<!tpu.dma_semaphore, #tpu.memory_space<semaphore_mem>>
    tpu.wait_dma2 semaphore(%173 : memref<!tpu.dma_semaphore, #tpu.memory_space<semaphore_mem>>) src(%arg14 : memref<128x64xbf16, #tpu.memory_space<any>>) dst(%arg21 : memref<128x64xbf16, #tpu.memory_space<vmem>>)
    %c5_i32_66 = arith.constant 5 : i32
    %174 = tpu.memref_slice %arg23[%c5_i32_66] : memref<6x!tpu.dma_semaphore, #tpu.memory_space<semaphore_mem>> -> memref<1x!tpu.dma_semaphore, #tpu.memory_space<semaphore_mem>>
    %175 = tpu.memref_squeeze %174 : memref<1x!tpu.dma_semaphore, #tpu.memory_space<semaphore_mem>> -> memref<!tpu.dma_semaphore, #tpu.memory_space<semaphore_mem>>
    tpu.wait_dma2 semaphore(%175 : memref<!tpu.dma_semaphore, #tpu.memory_space<semaphore_mem>>) src(%arg15 : memref<64x32xbf16, #tpu.memory_space<any>>) dst(%arg22 : memref<64x32xbf16, #tpu.memory_space<vmem>>)
    %cst_67 = arith.constant dense<0.000000e+00> : vector<8xf32>
    %176 = vector.multi_reduction <add>, %161, %cst_67 [0] : vector<8x8xf32> to vector<8xf32>
    %177 = vector.shape_cast %176 : vector<8xf32> to vector<1x8xf32>
    %cst_68 = arith.constant 8.000000e+00 : f32
    %178 = vector.broadcast %cst_68 : f32 to vector<1x8xf32>
    %179 = arith.divf %177, %178 : vector<1x8xf32>
    %180 = vector.broadcast %179 : vector<1x8xf32> to vector<8x8xf32>
    %181 = arith.subf %161, %180 : vector<8x8xf32>
    %182 = arith.mulf %181, %181 : vector<8x8xf32>
    %cst_69 = arith.constant dense<0.000000e+00> : vector<8xf32>
    %183 = vector.multi_reduction <add>, %182, %cst_69 [0] : vector<8x8xf32> to vector<8xf32>
    %184 = vector.shape_cast %183 : vector<8xf32> to vector<1x8xf32>
    %cst_70 = arith.constant 8.000000e+00 : f32
    %185 = vector.broadcast %cst_70 : f32 to vector<1x8xf32>
    %186 = arith.divf %184, %185 : vector<1x8xf32>
    %187 = vector.broadcast %179 : vector<1x8xf32> to vector<8x8xf32>
    %188 = arith.subf %161, %187 : vector<8x8xf32>
    %cst_71 = arith.constant 9.99999974E-6 : f32
    %189 = vector.broadcast %cst_71 : f32 to vector<1x8xf32>
    %190 = arith.addf %186, %189 : vector<1x8xf32>
    %191 = math.rsqrt %190 : vector<1x8xf32>
    %192 = vector.broadcast %191 : vector<1x8xf32> to vector<8x8xf32>
    %193 = arith.mulf %188, %192 : vector<8x8xf32>
    %c0_72 = arith.constant 0 : index
    %c0_73 = arith.constant 0 : index
    %194 = vector.load %arg17[%c0_72, %c0_73] : memref<8x64xbf16, #tpu.memory_space<vmem>>, vector<8x64xbf16>
    %c0_74 = arith.constant 0 : index
    %c816 = arith.constant 816 : index
    %195 = vector.load %arg3[%c0_74, %c816] : memref<1x1616xf32, #tpu.memory_space<vmem>>, vector<1x64xf32>
    %196 = arith.truncf %193 : vector<8x8xf32> to vector<8x8xbf16>
    %cst_75 = arith.constant dense<0.000000e+00> : vector<8x64xf32>
    %197 = tpu.matmul %196, %194, %cst_75 {dimension_numbers = #tpu.dot_dimension_numbers<[1], [0], [0], [1], [0, 0, 1, 1], [], []>} : vector<8x8xbf16>, vector<8x64xbf16>, vector<8x64xf32> -> vector<8x64xf32>
    %198 = vector.broadcast %195 : vector<1x64xf32> to vector<8x64xf32>
    %199 = arith.addf %197, %198 : vector<8x64xf32>
    %cst_76 = arith.constant 2.000000e-01 : f32
    %200 = vector.broadcast %cst_76 : f32 to vector<8x64xf32>
    %201 = arith.mulf %200, %199 : vector<8x64xf32>
    %202 = arith.maximumf %199, %201 : vector<8x64xf32>
    %cst_77 = arith.constant dense<0.000000e+00> : vector<64xf32>
    %203 = vector.multi_reduction <add>, %202, %cst_77 [0] : vector<8x64xf32> to vector<64xf32>
    %204 = vector.shape_cast %203 : vector<64xf32> to vector<1x64xf32>
    %cst_78 = arith.constant 8.000000e+00 : f32
    %205 = vector.broadcast %cst_78 : f32 to vector<1x64xf32>
    %206 = arith.divf %204, %205 : vector<1x64xf32>
    %207 = vector.broadcast %206 : vector<1x64xf32> to vector<8x64xf32>
    %208 = arith.subf %202, %207 : vector<8x64xf32>
    %209 = arith.mulf %208, %208 : vector<8x64xf32>
    %cst_79 = arith.constant dense<0.000000e+00> : vector<64xf32>
    %210 = vector.multi_reduction <add>, %209, %cst_79 [0] : vector<8x64xf32> to vector<64xf32>
    %211 = vector.shape_cast %210 : vector<64xf32> to vector<1x64xf32>
    %cst_80 = arith.constant 8.000000e+00 : f32
    %212 = vector.broadcast %cst_80 : f32 to vector<1x64xf32>
    %213 = arith.divf %211, %212 : vector<1x64xf32>
    %214 = vector.broadcast %206 : vector<1x64xf32> to vector<8x64xf32>
    %215 = arith.subf %202, %214 : vector<8x64xf32>
    %cst_81 = arith.constant 9.99999974E-6 : f32
    %216 = vector.broadcast %cst_81 : f32 to vector<1x64xf32>
    %217 = arith.addf %213, %216 : vector<1x64xf32>
    %218 = math.rsqrt %217 : vector<1x64xf32>
    %219 = vector.broadcast %218 : vector<1x64xf32> to vector<8x64xf32>
    %220 = arith.mulf %215, %219 : vector<8x64xf32>
    %c0_82 = arith.constant 0 : index
    %c0_83 = arith.constant 0 : index
    %221 = vector.load %arg18[%c0_82, %c0_83] : memref<64x256xbf16, #tpu.memory_space<vmem>>, vector<64x256xbf16>
    %c0_84 = arith.constant 0 : index
    %c880 = arith.constant 880 : index
    %222 = vector.load %arg3[%c0_84, %c880] : memref<1x1616xf32, #tpu.memory_space<vmem>>, vector<1x256xf32>
    %223 = arith.truncf %220 : vector<8x64xf32> to vector<8x64xbf16>
    %cst_85 = arith.constant dense<0.000000e+00> : vector<8x256xf32>
    %224 = tpu.matmul %223, %221, %cst_85 {dimension_numbers = #tpu.dot_dimension_numbers<[1], [0], [0], [1], [0, 0, 1, 1], [], []>} : vector<8x64xbf16>, vector<64x256xbf16>, vector<8x256xf32> -> vector<8x256xf32>
    %225 = vector.broadcast %222 : vector<1x256xf32> to vector<8x256xf32>
    %226 = arith.addf %224, %225 : vector<8x256xf32>
    %cst_86 = arith.constant 2.000000e-01 : f32
    %227 = vector.broadcast %cst_86 : f32 to vector<8x256xf32>
    %228 = arith.mulf %227, %226 : vector<8x256xf32>
    %229 = arith.maximumf %226, %228 : vector<8x256xf32>
    %cst_87 = arith.constant dense<0.000000e+00> : vector<256xf32>
    %230 = vector.multi_reduction <add>, %229, %cst_87 [0] : vector<8x256xf32> to vector<256xf32>
    %231 = vector.shape_cast %230 : vector<256xf32> to vector<1x256xf32>
    %cst_88 = arith.constant 8.000000e+00 : f32
    %232 = vector.broadcast %cst_88 : f32 to vector<1x256xf32>
    %233 = arith.divf %231, %232 : vector<1x256xf32>
    %234 = vector.broadcast %233 : vector<1x256xf32> to vector<8x256xf32>
    %235 = arith.subf %229, %234 : vector<8x256xf32>
    %236 = arith.mulf %235, %235 : vector<8x256xf32>
    %cst_89 = arith.constant dense<0.000000e+00> : vector<256xf32>
    %237 = vector.multi_reduction <add>, %236, %cst_89 [0] : vector<8x256xf32> to vector<256xf32>
    %238 = vector.shape_cast %237 : vector<256xf32> to vector<1x256xf32>
    %cst_90 = arith.constant 8.000000e+00 : f32
    %239 = vector.broadcast %cst_90 : f32 to vector<1x256xf32>
    %240 = arith.divf %238, %239 : vector<1x256xf32>
    %241 = vector.broadcast %233 : vector<1x256xf32> to vector<8x256xf32>
    %242 = arith.subf %229, %241 : vector<8x256xf32>
    %cst_91 = arith.constant 9.99999974E-6 : f32
    %243 = vector.broadcast %cst_91 : f32 to vector<1x256xf32>
    %244 = arith.addf %240, %243 : vector<1x256xf32>
    %245 = math.rsqrt %244 : vector<1x256xf32>
    %246 = vector.broadcast %245 : vector<1x256xf32> to vector<8x256xf32>
    %247 = arith.mulf %242, %246 : vector<8x256xf32>
    %c0_92 = arith.constant 0 : index
    %c0_93 = arith.constant 0 : index
    %248 = vector.load %arg19[%c0_92, %c0_93] : memref<256x256xbf16, #tpu.memory_space<vmem>>, vector<256x256xbf16>
    %c0_94 = arith.constant 0 : index
    %c1136 = arith.constant 1136 : index
    %249 = vector.load %arg3[%c0_94, %c1136] : memref<1x1616xf32, #tpu.memory_space<vmem>>, vector<1x256xf32>
    %250 = arith.truncf %247 : vector<8x256xf32> to vector<8x256xbf16>
    %cst_95 = arith.constant dense<0.000000e+00> : vector<8x256xf32>
    %251 = tpu.matmul %250, %248, %cst_95 {dimension_numbers = #tpu.dot_dimension_numbers<[1], [0], [0], [1], [0, 0, 1, 1], [], []>} : vector<8x256xbf16>, vector<256x256xbf16>, vector<8x256xf32> -> vector<8x256xf32>
    %252 = vector.broadcast %249 : vector<1x256xf32> to vector<8x256xf32>
    %253 = arith.addf %251, %252 : vector<8x256xf32>
    %cst_96 = arith.constant 2.000000e-01 : f32
    %254 = vector.broadcast %cst_96 : f32 to vector<8x256xf32>
    %255 = arith.mulf %254, %253 : vector<8x256xf32>
    %256 = arith.maximumf %253, %255 : vector<8x256xf32>
    %cst_97 = arith.constant dense<0.000000e+00> : vector<256xf32>
    %257 = vector.multi_reduction <add>, %256, %cst_97 [0] : vector<8x256xf32> to vector<256xf32>
    %258 = vector.shape_cast %257 : vector<256xf32> to vector<1x256xf32>
    %cst_98 = arith.constant 8.000000e+00 : f32
    %259 = vector.broadcast %cst_98 : f32 to vector<1x256xf32>
    %260 = arith.divf %258, %259 : vector<1x256xf32>
    %261 = vector.broadcast %260 : vector<1x256xf32> to vector<8x256xf32>
    %262 = arith.subf %256, %261 : vector<8x256xf32>
    %263 = arith.mulf %262, %262 : vector<8x256xf32>
    %cst_99 = arith.constant dense<0.000000e+00> : vector<256xf32>
    %264 = vector.multi_reduction <add>, %263, %cst_99 [0] : vector<8x256xf32> to vector<256xf32>
    %265 = vector.shape_cast %264 : vector<256xf32> to vector<1x256xf32>
    %cst_100 = arith.constant 8.000000e+00 : f32
    %266 = vector.broadcast %cst_100 : f32 to vector<1x256xf32>
    %267 = arith.divf %265, %266 : vector<1x256xf32>
    %268 = vector.broadcast %260 : vector<1x256xf32> to vector<8x256xf32>
    %269 = arith.subf %256, %268 : vector<8x256xf32>
    %cst_101 = arith.constant 9.99999974E-6 : f32
    %270 = vector.broadcast %cst_101 : f32 to vector<1x256xf32>
    %271 = arith.addf %267, %270 : vector<1x256xf32>
    %272 = math.rsqrt %271 : vector<1x256xf32>
    %273 = vector.broadcast %272 : vector<1x256xf32> to vector<8x256xf32>
    %274 = arith.mulf %269, %273 : vector<8x256xf32>
    %c0_102 = arith.constant 0 : index
    %c0_103 = arith.constant 0 : index
    %275 = vector.load %arg20[%c0_102, %c0_103] : memref<256x128xbf16, #tpu.memory_space<vmem>>, vector<256x128xbf16>
    %c0_104 = arith.constant 0 : index
    %c1392 = arith.constant 1392 : index
    %276 = vector.load %arg3[%c0_104, %c1392] : memref<1x1616xf32, #tpu.memory_space<vmem>>, vector<1x128xf32>
    %277 = arith.truncf %274 : vector<8x256xf32> to vector<8x256xbf16>
    %cst_105 = arith.constant dense<0.000000e+00> : vector<8x128xf32>
    %278 = tpu.matmul %277, %275, %cst_105 {dimension_numbers = #tpu.dot_dimension_numbers<[1], [0], [0], [1], [0, 0, 1, 1], [], []>} : vector<8x256xbf16>, vector<256x128xbf16>, vector<8x128xf32> -> vector<8x128xf32>
    %279 = vector.broadcast %276 : vector<1x128xf32> to vector<8x128xf32>
    %280 = arith.addf %278, %279 : vector<8x128xf32>
    %cst_106 = arith.constant 2.000000e-01 : f32
    %281 = vector.broadcast %cst_106 : f32 to vector<8x128xf32>
    %282 = arith.mulf %281, %280 : vector<8x128xf32>
    %283 = arith.maximumf %280, %282 : vector<8x128xf32>
    %cst_107 = arith.constant dense<0.000000e+00> : vector<128xf32>
    %284 = vector.multi_reduction <add>, %283, %cst_107 [0] : vector<8x128xf32> to vector<128xf32>
    %285 = vector.shape_cast %284 : vector<128xf32> to vector<1x128xf32>
    %cst_108 = arith.constant 8.000000e+00 : f32
    %286 = vector.broadcast %cst_108 : f32 to vector<1x128xf32>
    %287 = arith.divf %285, %286 : vector<1x128xf32>
    %288 = vector.broadcast %287 : vector<1x128xf32> to vector<8x128xf32>
    %289 = arith.subf %283, %288 : vector<8x128xf32>
    %290 = arith.mulf %289, %289 : vector<8x128xf32>
    %cst_109 = arith.constant dense<0.000000e+00> : vector<128xf32>
    %291 = vector.multi_reduction <add>, %290, %cst_109 [0] : vector<8x128xf32> to vector<128xf32>
    %292 = vector.shape_cast %291 : vector<128xf32> to vector<1x128xf32>
    %cst_110 = arith.constant 8.000000e+00 : f32
    %293 = vector.broadcast %cst_110 : f32 to vector<1x128xf32>
    %294 = arith.divf %292, %293 : vector<1x128xf32>
    %295 = vector.broadcast %287 : vector<1x128xf32> to vector<8x128xf32>
    %296 = arith.subf %283, %295 : vector<8x128xf32>
    %cst_111 = arith.constant 9.99999974E-6 : f32
    %297 = vector.broadcast %cst_111 : f32 to vector<1x128xf32>
    %298 = arith.addf %294, %297 : vector<1x128xf32>
    %299 = math.rsqrt %298 : vector<1x128xf32>
    %300 = vector.broadcast %299 : vector<1x128xf32> to vector<8x128xf32>
    %301 = arith.mulf %296, %300 : vector<8x128xf32>
    %c0_112 = arith.constant 0 : index
    %c0_113 = arith.constant 0 : index
    %302 = vector.load %arg21[%c0_112, %c0_113] : memref<128x64xbf16, #tpu.memory_space<vmem>>, vector<128x64xbf16>
    %c0_114 = arith.constant 0 : index
    %c1520 = arith.constant 1520 : index
    %303 = vector.load %arg3[%c0_114, %c1520] : memref<1x1616xf32, #tpu.memory_space<vmem>>, vector<1x64xf32>
    %304 = arith.truncf %301 : vector<8x128xf32> to vector<8x128xbf16>
    %cst_115 = arith.constant dense<0.000000e+00> : vector<8x64xf32>
    %305 = tpu.matmul %304, %302, %cst_115 {dimension_numbers = #tpu.dot_dimension_numbers<[1], [0], [0], [1], [0, 0, 1, 1], [], []>} : vector<8x128xbf16>, vector<128x64xbf16>, vector<8x64xf32> -> vector<8x64xf32>
    %306 = vector.broadcast %303 : vector<1x64xf32> to vector<8x64xf32>
    %307 = arith.addf %305, %306 : vector<8x64xf32>
    %cst_116 = arith.constant 2.000000e-01 : f32
    %308 = vector.broadcast %cst_116 : f32 to vector<8x64xf32>
    %309 = arith.mulf %308, %307 : vector<8x64xf32>
    %310 = arith.maximumf %307, %309 : vector<8x64xf32>
    %c0_117 = arith.constant 0 : index
    %c0_118 = arith.constant 0 : index
    %311 = vector.load %arg22[%c0_117, %c0_118] : memref<64x32xbf16, #tpu.memory_space<vmem>>, vector<64x32xbf16>
    %c0_119 = arith.constant 0 : index
    %c1584 = arith.constant 1584 : index
    %312 = vector.load %arg3[%c0_119, %c1584] : memref<1x1616xf32, #tpu.memory_space<vmem>>, vector<1x32xf32>
    %313 = arith.truncf %310 : vector<8x64xf32> to vector<8x64xbf16>
    %cst_120 = arith.constant dense<0.000000e+00> : vector<8x32xf32>
    %314 = tpu.matmul %313, %311, %cst_120 {dimension_numbers = #tpu.dot_dimension_numbers<[1], [0], [0], [1], [0, 0, 1, 1], [], []>} : vector<8x64xbf16>, vector<64x32xbf16>, vector<8x32xf32> -> vector<8x32xf32>
    %315 = vector.broadcast %312 : vector<1x32xf32> to vector<8x32xf32>
    %316 = arith.addf %314, %315 : vector<8x32xf32>
    %317 = vector.extract_strided_slice %316 {offsets = [0, 0], sizes = [8, 16], strides = [1, 1]} : vector<8x32xf32> to vector<8x16xf32>
    %318 = vector.extract_strided_slice %316 {offsets = [0, 16], sizes = [8, 16], strides = [1, 1]} : vector<8x32xf32> to vector<8x16xf32>
    %c0_121 = arith.constant 0 : index
    %c0_122 = arith.constant 0 : index
    %319 = vector.load %arg2[%c0_121, %c0_122] : memref<8x16xf32, #tpu.memory_space<vmem>>, vector<8x16xf32>
    %cst_123 = arith.constant 5.000000e-01 : f32
    %320 = vector.broadcast %cst_123 : f32 to vector<8x16xf32>
    %321 = arith.mulf %320, %318 : vector<8x16xf32>
    %322 = math.exp %321 : vector<8x16xf32>
    %323 = arith.mulf %319, %322 : vector<8x16xf32>
    %324 = arith.addf %323, %317 : vector<8x16xf32>
    %c0_124 = arith.constant 0 : index
    %c24 = arith.constant 24 : index
    %325 = vector.load %arg16[%c0_124, %c24] : memref<8x40xf32, #tpu.memory_space<vmem>>, vector<8x16xf32>
    tpu.vector_store %arg16[%c0_124, %c24], %324 {strides = array<i32>} : memref<8x40xf32, #tpu.memory_space<vmem>>, vector<8x16xf32>,
    return
  }
}

</mosaic_0001>

<llo_original>
// kernel: vae_forward.1
$region0: #{vae_forward.1}
  #allocation0 [shape = 'u32[]', space=smem, size = 0x4, offset = 0x4, fixed_abs, tag = 'smem constant byte address 0x4 - core index']
  #allocation1 [shape = 'u32[72,128]{1,0:T(1,128)}', space=vmem, size = 0x9000, scoped, tag = 'internal scratch']
  #allocation2 [shape = 'bf16[8,64]{1,0:T(8,128)(2,1)}', space=vmem, size = 0x800, scoped, tag = 'scratch operand']
  #allocation3 [shape = 'bf16[64,256]{1,0:T(8,128)(2,1)}', space=vmem, size = 0x8000, scoped, tag = 'scratch operand']
  #allocation4 [shape = 'bf16[256,256]{1,0:T(8,128)(2,1)}', space=vmem, size = 0x20000, scoped, tag = 'scratch operand']
  #allocation5 [shape = 'bf16[256,128]{1,0:T(8,128)(2,1)}', space=vmem, size = 0x10000, scoped, tag = 'scratch operand']
  #allocation6 [shape = 'bf16[128,64]{1,0:T(8,128)(2,1)}', space=vmem, size = 0x8000, scoped, tag = 'scratch operand']
  #allocation7 [shape = 'bf16[64,32]{1,0:T(8,128)(2,1)}', space=vmem, size = 0x4000, scoped, tag = 'scratch operand']
  #allocation8 [shape = 's32[6]{0}', space=sflag, size = 0x18, scoped, tag = 'scratch operand']
  #allocation22 [shape = 's32[]', space=sflag, size = 0x4, offset = 0, fixed_abs, tag = 'sflag constant byte address 0x0 - dummy sync flag']
  #allocation23 [shape = 's32[]', space=sflag, size = 0x4, offset = 0, fixed_abs, tag = 'sflag constant byte address 0x0 - dummy sync flag']
  #allocation24 [shape = 'u32[]', space=smem, size = 0x4, offset = 0x44, fixed_abs, tag = 'smem constant byte address 0x44 - assertion arg 0']
  #allocation25 [shape = 'u32[]', space=smem, size = 0x4, offset = 0x48, fixed_abs, tag = 'smem constant byte address 0x48 - assertion arg 1']
  #allocation26 [shape = 's32[]', space=sflag, size = 0x4, offset = 0, fixed_abs, tag = 'sflag constant byte address 0x0 - dummy sync flag']
  #allocation27 [shape = 's32[]', space=sflag, size = 0x4, offset = 0, fixed_abs, tag = 'sflag constant byte address 0x0 - dummy sync flag']
  #allocation28 [shape = 's32[]', space=sflag, size = 0x4, offset = 0, fixed_abs, tag = 'sflag constant byte address 0x0 - dummy sync flag']
  #allocation29 [shape = 's32[]', space=sflag, size = 0x4, offset = 0, fixed_abs, tag = 'sflag constant byte address 0x0 - dummy sync flag']
  #allocation30 [shape = 's32[]', space=sflag, size = 0x4, offset = 0, fixed_abs, tag = 'sflag constant byte address 0x0 - dummy sync flag']
  #allocation31 [shape = 's32[]', space=sflag, size = 0x4, offset = 0, fixed_abs, tag = 'sflag constant byte address 0x0 - dummy sync flag']
  #allocation32 [shape = 's32[]', space=sflag, size = 0x4, offset = 0, fixed_abs, tag = 'sflag constant byte address 0x0 - dummy sync flag']
  %s0 = inlined_call_operand.hbm [shape: f32[8,16], index: 0, kind: input, shape index: {}]
  %s1 = inlined_call_operand.hbm [shape: f32[8,8], index: 1, kind: input, shape index: {}]
  %s2 = inlined_call_operand.hbm [shape: f32[8,16], index: 2, kind: input, shape index: {}]
  %s3 = inlined_call_operand.hbm [shape: f32[1,1616], index: 3, kind: input, shape index: {}]
  %s4 = inlined_call_operand.hbm [shape: bf16[16,32], index: 4, kind: input, shape index: {}]
  %s5 = inlined_call_operand.hbm [shape: bf16[32,128], index: 5, kind: input, shape index: {}]
  %s6 = inlined_call_operand.vmem [shape: bf16[128,256], index: 6, kind: input, shape index: {}]
  %s7 = inlined_call_operand.hbm [shape: bf16[256,256], index: 7, kind: input, shape index: {}]
  %s8 = inlined_call_operand.hbm [shape: bf16[256,128], index: 8, kind: input, shape index: {}]
  %s9 = inlined_call_operand.vmem [shape: bf16[128,16], index: 9, kind: input, shape index: {}]
  %s10 = inlined_call_operand.hbm [shape: bf16[8,64], index: 10, kind: input, shape index: {}]
  %s11 = inlined_call_operand.vmem [shape: bf16[64,256], index: 11, kind: input, shape index: {}]
  %s12 = inlined_call_operand.hbm [shape: bf16[256,256], index: 12, kind: input, shape index: {}]
  %s13 = inlined_call_operand.hbm [shape: bf16[256,128], index: 13, kind: input, shape index: {}]
  %s14 = inlined_call_operand.vmem [shape: bf16[128,64], index: 14, kind: input, shape index: {}]
  %s15 = inlined_call_operand.vmem [shape: bf16[64,32], index: 15, kind: input, shape index: {}]
  %s16 = inlined_call_operand.vmem [shape: f32[8,40], index: 16, kind: output, shape index: {}]
  %s17 = sld [smem:[#allocation0]]
  $region151: #{vae_forward.1} parent=0
    _
  %s19 = ssub.s32 1, %s17
  %s20 = scalar_select 0, %s19, %s17
  $region1: #{vae_forward.1} parent=0
    #allocation9 [shape = 'u8[4096]{0}', space=vmem, size = 0x1000, scoped, tag = 'input window, operand 0, single buffered']
    #allocation10 [shape = 's32[1]{0}', space=sflag, size = 0x4, scoped, tag = 'scoped memory for vae_forward.1']
    #allocation11 [shape = 'u8[4096]{0}', space=vmem, size = 0x1000, scoped, tag = 'input window, operand 1, single buffered']
    #allocation12 [shape = 's32[1]{0}', space=sflag, size = 0x4, scoped, tag = 'scoped memory for vae_forward.1']
    #allocation13 [shape = 'u8[4096]{0}', space=vmem, size = 0x1000, scoped, tag = 'input window, operand 2, single buffered']
    #allocation14 [shape = 'u8[6656]{0}', space=vmem, size = 0x1c00, scoped, tag = 'input window, operand 3, single buffered']
    #allocation15 [shape = 's32[1]{0}', space=sflag, size = 0x4, scoped, tag = 'scoped memory for vae_forward.1']
    #allocation16 [shape = 'u8[4096]{0}', space=vmem, size = 0x1000, scoped, tag = 'input window, operand 4, single buffered']
    #allocation17 [shape = 'u8[8192]{0}', space=vmem, size = 0x2000, scoped, tag = 'input window, operand 5, single buffered']
    #allocation18 [shape = 's32[1]{0}', space=sflag, size = 0x4, scoped, tag = 'scoped memory for vae_forward.1']
    #allocation19 [shape = 'u8[131072]{0}', space=vmem, size = 0x20000, scoped, tag = 'input window, operand 7, single buffered']
    #allocation20 [shape = 'u8[65536]{0}', space=vmem, size = 0x10000, scoped, tag = 'input window, operand 8, single buffered']
    #allocation21 [shape = 's32[1]{0}', space=sflag, size = 0x4, scoped, tag = 'scoped memory for vae_forward.1']
    %21 = vsyncpa [#allocation10], 0
    %22 = vsyncpa [#allocation12], 0
    %23 = vsyncpa [#allocation15], 0
    %24 = vsyncpa [#allocation18], 0
    %25 = vsyncpa [#allocation21], 0
    // Predicated region
    $region2: #{vae_forward.1} parent=1 // pred_check
      _
    $region3: #{vae_forward.1} parent=1 // pred_check_branch
      %27 = sbr.rel (0) target = $region5
    $region4: #{vae_forward.1} parent=1 // pred_region
      %29 = vsyncadd [#allocation10], 0
      %s31 = sshll.u32 %s0, 4
      %s32 = int_to_ptr.hbm [resolvable:$true] %s31
      %s33 = sshll.u32 [#allocation9], 4
      %s34 = int_to_ptr.vmem [resolvable:$true] %s33
      %36 = dma.hbm_to_vmem [thread:$0]  %s32, 128, %s34, [#allocation10]
    $region5: #{vae_forward.1} parent=1 // pred_fallthru
      _
    // Predicated region
    $region6: #{vae_forward.1} parent=1 // pred_check
      _
    $region7: #{vae_forward.1} parent=1 // pred_check_branch
      %38 = sbr.rel (0) target = $region9
    $region8: #{vae_forward.1} parent=1 // pred_region
      %40 = vsyncadd [#allocation12], 0
      %s42 = sshll.u32 %s1, 4
      %s43 = int_to_ptr.hbm [resolvable:$true] %s42
      %s44 = sshll.u32 [#allocation11], 4
      %s45 = int_to_ptr.vmem [resolvable:$true] %s44
      %47 = dma.hbm_to_vmem [thread:$0]  %s43, 128, %s45, [#allocation12]
    $region9: #{vae_forward.1} parent=1 // pred_fallthru
      _
    // Predicated region
    $region10: #{vae_forward.1} parent=1 // pred_check
      _
    $region11: #{vae_forward.1} parent=1 // pred_check_branch
      %49 = sbr.rel (0) target = $region13
    $region12: #{vae_forward.1} parent=1 // pred_region
      %51 = vsyncadd [#allocation12], 0
      %s53 = sshll.u32 %s2, 4
      %s54 = int_to_ptr.hbm [resolvable:$true] %s53
      %s55 = sshll.u32 [#allocation13], 4
      %s56 = int_to_ptr.vmem [resolvable:$true] %s55
      %58 = dma.hbm_to_vmem [thread:$0]  %s54, 128, %s56, [#allocation12]
    $region13: #{vae_forward.1} parent=1 // pred_fallthru
      _
    // Predicated region
    $region14: #{vae_forward.1} parent=1 // pred_check
      _
    $region15: #{vae_forward.1} parent=1 // pred_check_branch
      %60 = sbr.rel (0) target = $region17
    $region16: #{vae_forward.1} parent=1 // pred_region
      %62 = vsyncadd [#allocation15], 0
      %s64 = sshll.u32 %s3, 4
      %s65 = int_to_ptr.hbm [resolvable:$true] %s64
      %s66 = sshll.u32 [#allocation14], 4
      %s67 = int_to_ptr.vmem [resolvable:$true] %s66
      %69 = dma.hbm_to_vmem [thread:$0]  %s65, 208, %s67, [#allocation15]
    $region17: #{vae_forward.1} parent=1 // pred_fallthru
      _
    // Predicated region
    $region18: #{vae_forward.1} parent=1 // pred_check
      _
    $region19: #{vae_forward.1} parent=1 // pred_check_branch
      %71 = sbr.rel (0) target = $region21
    $region20: #{vae_forward.1} parent=1 // pred_region
      %73 = vsyncadd [#allocation15], 0
      %s74 = sshll.u32 %s4, 4
      %s75 = int_to_ptr.hbm [resolvable:$true] %s74
      %s76 = sshll.u32 [#allocation16], 4
      %s77 = int_to_ptr.vmem [resolvable:$true] %s76
      %82 = dma.hbm_to_vmem [thread:$0]  %s75, 128, %s77, [#allocation15], 64, 64, 4
    $region21: #{vae_forward.1} parent=1 // pred_fallthru
      _
    // Predicated region
    $region22: #{vae_forward.1} parent=1 // pred_check
      _
    $region23: #{vae_forward.1} parent=1 // pred_check_branch
      %84 = sbr.rel (0) target = $region25
    $region24: #{vae_forward.1} parent=1 // pred_region
      %86 = vsyncadd [#allocation18], 0
      %s87 = sshll.u32 %s5, 4
      %s88 = int_to_ptr.hbm [resolvable:$true] %s87
      %s89 = sshll.u32 [#allocation17], 4
      %s90 = int_to_ptr.vmem [resolvable:$true] %s89
      %95 = dma.hbm_to_vmem [thread:$0]  %s88, 256, %s90, [#allocation18], 64, 64, 4
    $region25: #{vae_forward.1} parent=1 // pred_fallthru
      _
    // Predicated region
    $region26: #{vae_forward.1} parent=1 // pred_check
      _
    $region27: #{vae_forward.1} parent=1 // pred_check_branch
      %97 = sbr.rel (0) target = $region29
    $region28: #{vae_forward.1} parent=1 // pred_region
      _
    $region29: #{vae_forward.1} parent=1 // pred_fallthru
      _
    // Predicated region
    $region30: #{vae_forward.1} parent=1 // pred_check
      _
    $region31: #{vae_forward.1} parent=1 // pred_check_branch
      %99 = sbr.rel (0) target = $region33
    $region32: #{vae_forward.1} parent=1 // pred_region
      %101 = vsyncadd [#allocation18], 0
      %s102 = sshll.u32 %s7, 4
      %s103 = int_to_ptr.hbm [resolvable:$true] %s102
      %s104 = sshll.u32 [#allocation19], 4
      %s105 = int_to_ptr.vmem [resolvable:$true] %s104
      %110 = dma.hbm_to_vmem [thread:$0]  %s103, 4096, %s105, [#allocation18], 128, 128, 8
    $region33: #{vae_forward.1} parent=1 // pred_fallthru
      _
    // Predicated region
    $region34: #{vae_forward.1} parent=1 // pred_check
      _
    $region35: #{vae_forward.1} parent=1 // pred_check_branch
      %112 = sbr.rel (0) target = $region37
    $region36: #{vae_forward.1} parent=1 // pred_region
      %114 = vsyncadd [#allocation21], 0
      %s115 = sshll.u32 %s8, 4
      %s116 = int_to_ptr.hbm [resolvable:$true] %s115
      %s117 = sshll.u32 [#allocation20], 4
      %s118 = int_to_ptr.vmem [resolvable:$true] %s117
      %123 = dma.hbm_to_vmem [thread:$0]  %s116, 2048, %s118, [#allocation21], 64, 64, 4
    $region37: #{vae_forward.1} parent=1 // pred_fallthru
      _
    // Predicated region
    $region38: #{vae_forward.1} parent=1 // pred_check
      _
    $region39: #{vae_forward.1} parent=1 // pred_check_branch
      %125 = sbr.rel (0) target = $region41
    $region40: #{vae_forward.1} parent=1 // pred_region
      _
    $region41: #{vae_forward.1} parent=1 // pred_fallthru
      _
    // Predicated region
    $region42: #{vae_forward.1} parent=1 // pred_check
      _
    $region43: #{vae_forward.1} parent=1 // pred_check_branch
      %127 = sbr.rel (0) target = $region45
    $region44: #{vae_forward.1} parent=1 // pred_region
      %129 = dma.done [#allocation10], 128
    $region45: #{vae_forward.1} parent=1 // pred_fallthru
      _
    // Predicated region
    $region46: #{vae_forward.1} parent=1 // pred_check
      _
    $region47: #{vae_forward.1} parent=1 // pred_check_branch
      %131 = sbr.rel (0) target = $region49
    $region48: #{vae_forward.1} parent=1 // pred_region
      %133 = dma.done [#allocation12], 128
    $region49: #{vae_forward.1} parent=1 // pred_fallthru
      _
    // Predicated region
    $region50: #{vae_forward.1} parent=1 // pred_check
      _
    $region51: #{vae_forward.1} parent=1 // pred_check_branch
      %135 = sbr.rel (0) target = $region53
    $region52: #{vae_forward.1} parent=1 // pred_region
      %137 = dma.done [#allocation12], 128
    $region53: #{vae_forward.1} parent=1 // pred_fallthru
      _
    // Predicated region
    $region54: #{vae_forward.1} parent=1 // pred_check
      _
    $region55: #{vae_forward.1} parent=1 // pred_check_branch
      %139 = sbr.rel (0) target = $region57
    $region56: #{vae_forward.1} parent=1 // pred_region
      %141 = dma.done [#allocation15], 208
    $region57: #{vae_forward.1} parent=1 // pred_fallthru
      _
    // Predicated region
    $region58: #{vae_forward.1} parent=1 // pred_check
      _
    $region59: #{vae_forward.1} parent=1 // pred_check_branch
      %143 = sbr.rel (0) target = $region61
    $region60: #{vae_forward.1} parent=1 // pred_region
      %145 = dma.done [#allocation15], 128
    $region61: #{vae_forward.1} parent=1 // pred_fallthru
      _
    // Predicated region
    $region62: #{vae_forward.1} parent=1 // pred_check
      _
    $region63: #{vae_forward.1} parent=1 // pred_check_branch
      %147 = sbr.rel (0) target = $region65
    $region64: #{vae_forward.1} parent=1 // pred_region
      %149 = dma.done [#allocation18], 256
    $region65: #{vae_forward.1} parent=1 // pred_fallthru
      _
    // Predicated region
    $region66: #{vae_forward.1} parent=1 // pred_check
      _
    $region67: #{vae_forward.1} parent=1 // pred_check_branch
      %151 = sbr.rel (0) target = $region69
    $region68: #{vae_forward.1} parent=1 // pred_region
      %153 = dma.done [#allocation18], 4096
    $region69: #{vae_forward.1} parent=1 // pred_fallthru
      _
    // Predicated region
    $region70: #{vae_forward.1} parent=1 // pred_check
      _
    $region71: #{vae_forward.1} parent=1 // pred_check_branch
      %155 = sbr.rel (0) target = $region73
    $region72: #{vae_forward.1} parent=1 // pred_region
      %157 = dma.done [#allocation21], 2048
    $region73: #{vae_forward.1} parent=1 // pred_fallthru
      _
    // Predicated region
    $region74: #{vae_forward.1} parent=1 // pred_check
      _
    $region75: #{vae_forward.1} parent=1 // pred_check_branch
      %160 = sbr.rel target = $region77
    $region76: #{vae_forward.1} parent=1 // pred_region
      %161 = sst [smem:[#allocation24]] [#allocation23]
      %162 = sst [smem:[#allocation25]] [#allocation22]
    $region77: #{vae_forward.1} parent=1 // pred_fallthru
      _
    %164 = shalt.err (0)
    %s166 = sshll.u32 %s10, 4
    %s167 = int_to_ptr.hbm [resolvable:$true] %s166
    %s168 = sshll.u32 [#allocation2], 4
    %s169 = int_to_ptr.vmem [resolvable:$true] %s168
    %171 = dma.hbm_to_vmem [thread:$0]  %s167, 64, %s169, [#allocation8]
    %s172 = scalar_lea.sflag [#allocation8], 1
    // Predicated region
    $region78: #{vae_forward.1} parent=1 // pred_check
      _
    $region79: #{vae_forward.1} parent=1 // pred_check_branch
      %174 = sbr.rel (0) target = $region81
    $region80: #{vae_forward.1} parent=1 // pred_region
      loop: start=0, step=1, limit=1
      $region82: #{vae_forward.1} parent=80 // loop_pre_header
        _
      $region83: #{vae_forward.1} parent=80 // loop_header
        %s176 = sphi 0, %s180
        %p177 = scmp.ge.s32.totalorder %s176, 1
        %s181 = sphi %s11, %s11
        %s182 = sphi [#allocation3], [#allocation3]
      $region84: #{vae_forward.1} parent=80 // loop_header_branch
        %179 = sbr.rel (%p177) target = $region88
      $region85: #{vae_forward.1} parent=80 // loop_body
        %v183 = vld [vmem:[%s181] sm:$0xff]
        %184 = vst [vmem:[%s182] sm:$0xff] %v183
        %v185 = vld [vmem:[%s181 + $0x8] sm:$0xff]
        %186 = vst [vmem:[%s182 + $0x8] sm:$0xff] %v185
        %v187 = vld [vmem:[%s181 + $0x10] sm:$0xff]
        %188 = vst [vmem:[%s182 + $0x10] sm:$0xff] %v187
        %v189 = vld [vmem:[%s181 + $0x18] sm:$0xff]
        %190 = vst [vmem:[%s182 + $0x18] sm:$0xff] %v189
        %v191 = vld [vmem:[%s181 + $0x20] sm:$0xff]
        %192 = vst [vmem:[%s182 + $0x20] sm:$0xff] %v191
        %v193 = vld [vmem:[%s181 + $0x28] sm:$0xff]
        %194 = vst [vmem:[%s182 + $0x28] sm:$0xff] %v193
        %v195 = vld [vmem:[%s181 + $0x30] sm:$0xff]
        %196 = vst [vmem:[%s182 + $0x30] sm:$0xff] %v195
        %v197 = vld [vmem:[%s181 + $0x38] sm:$0xff]
        %198 = vst [vmem:[%s182 + $0x38] sm:$0xff] %v197
      $region86: #{vae_forward.1} parent=80 // loop_footer
        %s180 = sadd.s32 1, %s176
      $region87: #{vae_forward.1} parent=80 // loop_footer_branch
        %175 = sbr.rel target = $region83
      $region88: #{vae_forward.1} parent=80 // loop_exit
        _
    $region81: #{vae_forward.1} parent=1 // pred_fallthru
      _
    // Predicated region
    $region89: #{vae_forward.1} parent=1 // pred_check
      _
    $region90: #{vae_forward.1} parent=1 // pred_check_branch
      %200 = sbr.rel target = $region92
    $region91: #{vae_forward.1} parent=1 // pred_region
      _
    $region92: #{vae_forward.1} parent=1 // pred_fallthru
      _
    // Predicated region
    $region93: #{vae_forward.1} parent=1 // pred_check
      _
    $region94: #{vae_forward.1} parent=1 // pred_check_branch
      %203 = sbr.rel (0) target = $region96
    $region95: #{vae_forward.1} parent=1 // pred_region
      %204 = vsyncadd %s172, 1024
    $region96: #{vae_forward.1} parent=1 // pred_fallthru
      _
    %s205 = scalar_lea.sflag [#allocation8], 2
    // Predicated region
    $region97: #{vae_forward.1} parent=1 // pred_check
      _
    $region98: #{vae_forward.1} parent=1 // pred_check_branch
      %207 = sbr.rel target = $region100
    $region99: #{vae_forward.1} parent=1 // pred_region
      %208 = sst [smem:[#allocation24]] [#allocation28]
      %209 = sst [smem:[#allocation25]] [#allocation27]
    $region100: #{vae_forward.1} parent=1 // pred_fallthru
      _
    %211 = shalt.err (0)
    %s213 = sshll.u32 %s12, 4
    %s214 = int_to_ptr.hbm [resolvable:$true] %s213
    %s215 = sshll.u32 [#allocation4], 4
    %s216 = int_to_ptr.vmem [resolvable:$true] %s215
    %218 = dma.hbm_to_vmem [thread:$0]  %s214, 4096, %s216, %s205
    %s219 = scalar_lea.sflag [#allocation8], 3
    // Predicated region
    $region101: #{vae_forward.1} parent=1 // pred_check
      _
    $region102: #{vae_forward.1} parent=1 // pred_check_branch
      %221 = sbr.rel target = $region104
    $region103: #{vae_forward.1} parent=1 // pred_region
      %222 = sst [smem:[#allocation24]] [#allocation30]
      %223 = sst [smem:[#allocation25]] [#allocation29]
    $region104: #{vae_forward.1} parent=1 // pred_fallthru
      _
    %225 = shalt.err (0)
    %s227 = sshll.u32 %s13, 4
    %s228 = int_to_ptr.hbm [resolvable:$true] %s227
    %s229 = sshll.u32 [#allocation5], 4
    %s230 = int_to_ptr.vmem [resolvable:$true] %s229
    %232 = dma.hbm_to_vmem [thread:$0]  %s228, 2048, %s230, %s219
    %s233 = scalar_lea.sflag [#allocation8], 4
    // Predicated region
    $region105: #{vae_forward.1} parent=1 // pred_check
      _
    $region106: #{vae_forward.1} parent=1 // pred_check_branch
      %235 = sbr.rel (0) target = $region108
    $region107: #{vae_forward.1} parent=1 // pred_region
      loop: start=0, step=1, limit=1
      $region109: #{vae_forward.1} parent=107 // loop_pre_header
        _
      $region110: #{vae_forward.1} parent=107 // loop_header
        %s237 = sphi 0, %s241
        %p238 = scmp.ge.s32.totalorder %s237, 1
        %s242 = sphi %s14, %s14
        %s243 = sphi [#allocation6], [#allocation6]
      $region111: #{vae_forward.1} parent=107 // loop_header_branch
        %240 = sbr.rel (%p238) target = $region115
      $region112: #{vae_forward.1} parent=107 // loop_body
        %v244 = vld [vmem:[%s242] sm:$0xff]
        %245 = vst [vmem:[%s243] sm:$0xff] %v244
        %v246 = vld [vmem:[%s242 + $0x8] sm:$0xff]
        %247 = vst [vmem:[%s243 + $0x8] sm:$0xff] %v246
        %v248 = vld [vmem:[%s242 + $0x10] sm:$0xff]
        %249 = vst [vmem:[%s243 + $0x10] sm:$0xff] %v248
        %v250 = vld [vmem:[%s242 + $0x18] sm:$0xff]
        %251 = vst [vmem:[%s243 + $0x18] sm:$0xff] %v250
        %v252 = vld [vmem:[%s242 + $0x20] sm:$0xff]
        %253 = vst [vmem:[%s243 + $0x20] sm:$0xff] %v252
        %v254 = vld [vmem:[%s242 + $0x28] sm:$0xff]
        %255 = vst [vmem:[%s243 + $0x28] sm:$0xff] %v254
        %v256 = vld [vmem:[%s242 + $0x30] sm:$0xff]
        %257 = vst [vmem:[%s243 + $0x30] sm:$0xff] %v256
        %v258 = vld [vmem:[%s242 + $0x38] sm:$0xff]
        %259 = vst [vmem:[%s243 + $0x38] sm:$0xff] %v258
      $region113: #{vae_forward.1} parent=107 // loop_footer
        %s241 = sadd.s32 1, %s237
      $region114: #{vae_forward.1} parent=107 // loop_footer_branch
        %236 = sbr.rel target = $region110
      $region115: #{vae_forward.1} parent=107 // loop_exit
        _
    $region108: #{vae_forward.1} parent=1 // pred_fallthru
      _
    // Predicated region
    $region116: #{vae_forward.1} parent=1 // pred_check
      _
    $region117: #{vae_forward.1} parent=1 // pred_check_branch
      %261 = sbr.rel target = $region119
    $region118: #{vae_forward.1} parent=1 // pred_region
      _
    $region119: #{vae_forward.1} parent=1 // pred_fallthru
      _
    // Predicated region
    $region120: #{vae_forward.1} parent=1 // pred_check
      _
    $region121: #{vae_forward.1} parent=1 // pred_check_branch
      %264 = sbr.rel (0) target = $region123
    $region122: #{vae_forward.1} parent=1 // pred_region
      %265 = vsyncadd %s233, 1024
    $region123: #{vae_forward.1} parent=1 // pred_fallthru
      _
    %s266 = scalar_lea.sflag [#allocation8], 5
    // Predicated region
    $region124: #{vae_forward.1} parent=1 // pred_check
      _
    $region125: #{vae_forward.1} parent=1 // pred_check_branch
      %268 = sbr.rel (0) target = $region127
    $region126: #{vae_forward.1} parent=1 // pred_region
      loop: start=0, step=1, limit=1
      $region128: #{vae_forward.1} parent=126 // loop_pre_header
        _
      $region129: #{vae_forward.1} parent=126 // loop_header
        %s270 = sphi 0, %s274
        %p271 = scmp.ge.s32.totalorder %s270, 1
        %s275 = sphi %s15, %s15
        %s276 = sphi [#allocation7], [#allocation7]
      $region130: #{vae_forward.1} parent=126 // loop_header_branch
        %273 = sbr.rel (%p271) target = $region134
      $region131: #{vae_forward.1} parent=126 // loop_body
        %v277 = vld [vmem:[%s275] sm:$0xff]
        %278 = vst [vmem:[%s276] sm:$0xff] %v277
        %v279 = vld [vmem:[%s275 + $0x8] sm:$0xff]
        %280 = vst [vmem:[%s276 + $0x8] sm:$0xff] %v279
        %v281 = vld [vmem:[%s275 + $0x10] sm:$0xff]
        %282 = vst [vmem:[%s276 + $0x10] sm:$0xff] %v281
        %v283 = vld [vmem:[%s275 + $0x18] sm:$0xff]
        %284 = vst [vmem:[%s276 + $0x18] sm:$0xff] %v283
      $region132: #{vae_forward.1} parent=126 // loop_footer
        %s274 = sadd.s32 1, %s270
      $region133: #{vae_forward.1} parent=126 // loop_footer_branch
        %269 = sbr.rel target = $region129
      $region134: #{vae_forward.1} parent=126 // loop_exit
        _
    $region127: #{vae_forward.1} parent=1 // pred_fallthru
      _
    // Predicated region
    $region135: #{vae_forward.1} parent=1 // pred_check
      _
    $region136: #{vae_forward.1} parent=1 // pred_check_branch
      %286 = sbr.rel target = $region138
    $region137: #{vae_forward.1} parent=1 // pred_region
      _
    $region138: #{vae_forward.1} parent=1 // pred_fallthru
      _
    // Predicated region
    $region139: #{vae_forward.1} parent=1 // pred_check
      _
    $region140: #{vae_forward.1} parent=1 // pred_check_branch
      %289 = sbr.rel (0) target = $region142
    $region141: #{vae_forward.1} parent=1 // pred_region
      %290 = vsyncadd %s266, 512
    $region142: #{vae_forward.1} parent=1 // pred_fallthru
      _
    %v291 = vld [vmem:[#allocation9] sm:$0xff]
    %vm292 = vcmask 130048
    %v293 = vsel %vm292, %v291, 0.0
    %v294 = vrot.slane %v293, 4
    %v295 = vadd.f32 %v293, %v294
    %v296 = vrot.slane %v295, 2
    %v297 = vadd.f32 %v295, %v296
    %v298 = vrot.slane %v297, 1
    %v299 = vadd.f32 %v297, %v298
    %v300 = vrcp.pop 8.0
    %v301 = vmul.f32 8.0, %v300
    %v302 = vsub.f32 1.0, %v301
    %v303 = vmul.f32 %v300, %v302
    %v304 = vadd.f32 %v300, %v303
    %vm305 = vweird.f32 %v300
    %v306 = vsel %vm305, %v300, %v304
    %v307 = vmul.f32 %v299, %v306
    %v308 = vsub.f32 %v291, %v307
    %v309 = vmul.f32 %v308, %v308
    %v310 = vsel %vm292, %v309, 0.0
    %v311 = vrot.slane %v310, 4
    %v312 = vadd.f32 %v310, %v311
    %v313 = vrot.slane %v312, 2
    %v314 = vadd.f32 %v312, %v313
    %v315 = vrot.slane %v314, 1
    %v316 = vadd.f32 %v314, %v315
    %v317 = vmul.f32 %v316, %v306
    %v318 = vadd.f32 %v317, 1e-05
    %v319 = vrsqrt.pop %v318
    %v320 = vmul.f32 %v319, %v318
    %v321 = vmul.f32 %v320, %v319
    %v322 = vmul.f32 0.5, %v321
    %v323 = vsub.f32 1.5, %v322
    %v324 = vmul.f32 %v319, %v323
    %vm325 = vweird.f32 %v318
    %vm326 = vweird.f32 %v319
    %vm327 = vmor %vm325, %vm326
    %v328 = vsel %vm327, %v319, %v324
    %v329 = vmul.f32 %v308, %v328
    %v330 = vld [vmem:[#allocation16] sm:$0xf]
    %v331 = vld [vmem:[#allocation16 + $0x4] sm:$0xf]
    %v332 = vld [vmem:[#allocation14] sm:$0x1]
    %v333 = vpack.c.bf16 %v329, %v329
    %v335 = vperm.slane %v332, 0
    %v339 = vunpack.c.l.b16 %v330
    %v340 = vunpack.c.l.b16 %v331
    %v341 = vpack.c.b16 %v340, %v339
    %v344 = vsel %vm292, %v333, 0
    %346 = vmatpush.bf16.msra.mxu0 0
    %347 = vmatpush.bf16.msra.mxu0 0
    %348 = vmatpush.bf16.msra.mxu0 0
    %349 = vmatpush.bf16.msra.mxu0 0
    %350 = vmatpush.bf16.msra.mxu0 0
    %351 = vmatpush.bf16.msra.mxu0 0
    %352 = vmatpush.bf16.msra.mxu0 0
    %353 = vmatpush.bf16.msra.mxu0 %v341
    %354 = vmatmul.bf16.gmra.mxu0 %v344
    %v355 = vpop.f32.mrf.mxu0
    %v356 = vadd.f32 %v335, %v355
    %v357 = vpop.f32.mrf.mxu0
    %358 = vdwg.mxu0
    %v359 = vmul.f32 %v356, 0.2
    %v360 = vmax.f32 %v356, %v359
    %vm361 = vcmask 261120
    %v362 = vsel %vm361, %v360, 0.0
    %v363 = vrot.slane %v362, 4
    %v364 = vadd.f32 %v362, %v363
    %v365 = vrot.slane %v364, 2
    %v366 = vadd.f32 %v364, %v365
    %v367 = vrot.slane %v366, 1
    %v368 = vadd.f32 %v366, %v367
    %v369 = vmul.f32 %v368, %v306
    %v370 = vsub.f32 %v360, %v369
    %v371 = vmul.f32 %v370, %v370
    %v372 = vsel %vm361, %v371, 0.0
    %v373 = vrot.slane %v372, 4
    %v374 = vadd.f32 %v372, %v373
    %v375 = vrot.slane %v374, 2
    %v376 = vadd.f32 %v374, %v375
    %v377 = vrot.slane %v376, 1
    %v378 = vadd.f32 %v376, %v377
    %v379 = vmul.f32 %v378, %v306
    %v380 = vadd.f32 %v379, 1e-05
    %v381 = vrsqrt.pop %v380
    %v382 = vmul.f32 %v381, %v380
    %v383 = vmul.f32 %v382, %v381
    %v384 = vmul.f32 0.5, %v383
    %v385 = vsub.f32 1.5, %v384
    %v386 = vmul.f32 %v381, %v385
    %vm387 = vweird.f32 %v380
    %vm388 = vweird.f32 %v381
    %vm389 = vmor %vm387, %vm388
    %v390 = vsel %vm389, %v381, %v386
    %v391 = vmul.f32 %v370, %v390
    %v392 = vld [vmem:[#allocation17] sm:$0xf]
    %v393 = vld [vmem:[#allocation17 + $0x4] sm:$0xf]
    %v394 = vld [vmem:[#allocation17 + $0x8] sm:$0xf]
    %v395 = vld [vmem:[#allocation17 + $0xc] sm:$0xf]
    %v396 = vld [vmem:[#allocation14] sm:$0x3]
    %v397 = vpack.c.bf16 %v391, %v391
    %v399 = vperm.slane %v396, 0
    %v400 = vperm.slane %v396, 1
    %v405 = vunpack.c.l.b16 %v392
    %v406 = vunpack.c.l.b16 %v393
    %v407 = vunpack.c.l.b16 %v394
    %v408 = vunpack.c.l.b16 %v395
    %v409 = vpack.c.b16 %v406, %v405
    %v410 = vpack.c.b16 %v408, %v407
    %413 = vrot.lane.b32.xlu0 %v399, 96
    %v414 = vpop.permute.xlu0 %413
    %415 = vrot.lane.b32.xlu0 %v400, 96
    %v416 = vpop.permute.xlu0 %415
    %vm417 = vcmask 785408
    %v418 = vsel %vm417, %v414, %v416
    %v421 = vsel %vm361, %v397, 0
    %423 = vmatpush.bf16.msra.mxu0 0
    %424 = vmatpush.bf16.msra.mxu0 0
    %425 = vmatpush.bf16.msra.mxu0 0
    %426 = vmatpush.bf16.msra.mxu0 0
    %427 = vmatpush.bf16.msra.mxu0 0
    %428 = vmatpush.bf16.msra.mxu0 0
    %429 = vmatpush.bf16.msra.mxu0 %v410
    %430 = vmatpush.bf16.msra.mxu0 %v409
    %431 = vmatmul.bf16.gmra.mxu0 %v421
    %v432 = vpop.f32.mrf.mxu0
    %v433 = vadd.f32 %v418, %v432
    %v434 = vpop.f32.mrf.mxu0
    %435 = vdwg.mxu0
    %v436 = vmul.f32 %v433, 0.2
    %v437 = vmax.f32 %v433, %v436
    %v438 = vrot.slane %v437, 4
    %v439 = vadd.f32 %v437, %v438
    %v440 = vrot.slane %v439, 2
    %v441 = vadd.f32 %v439, %v440
    %v442 = vrot.slane %v441, 1
    %v443 = vadd.f32 %v441, %v442
    %v444 = vmul.f32 %v443, %v306
    %v445 = vsub.f32 %v437, %v444
    %v446 = vmul.f32 %v445, %v445
    %v447 = vrot.slane %v446, 4
    %v448 = vadd.f32 %v446, %v447
    %v449 = vrot.slane %v448, 2
    %v450 = vadd.f32 %v448, %v449
    %v451 = vrot.slane %v450, 1
    %v452 = vadd.f32 %v450, %v451
    %v453 = vmul.f32 %v452, %v306
    %v454 = vadd.f32 %v453, 1e-05
    %v455 = vrsqrt.pop %v454
    %v456 = vmul.f32 %v455, %v454
    %v457 = vmul.f32 %v456, %v455
    %v458 = vmul.f32 0.5, %v457
    %v459 = vsub.f32 1.5, %v458
    %v460 = vmul.f32 %v455, %v459
    %vm461 = vweird.f32 %v454
    %vm462 = vweird.f32 %v455
    %vm463 = vmor %vm461, %vm462
    %v464 = vsel %vm463, %v455, %v460
    %v465 = vmul.f32 %v445, %v464
    %v466 = vld [vmem:[%s6] sm:$0xff]
    %v467 = vld [vmem:[%s6 + $0x8] sm:$0xff]
    %v468 = vld [vmem:[%s6 + $0x10] sm:$0xff]
    %v469 = vld [vmem:[%s6 + $0x18] sm:$0xff]
    %v470 = vld [vmem:[%s6 + $0x20] sm:$0xff]
    %v471 = vld [vmem:[%s6 + $0x28] sm:$0xff]
    %v472 = vld [vmem:[%s6 + $0x30] sm:$0xff]
    %v473 = vld [vmem:[%s6 + $0x38] sm:$0xff]
    %v474 = vld [vmem:[%s6 + $0x40] sm:$0xff]
    %v475 = vld [vmem:[%s6 + $0x48] sm:$0xff]
    %v476 = vld [vmem:[%s6 + $0x50] sm:$0xff]
    %v477 = vld [vmem:[%s6 + $0x58] sm:$0xff]
    %v478 = vld [vmem:[%s6 + $0x60] sm:$0xff]
    %v479 = vld [vmem:[%s6 + $0x68] sm:$0xff]
    %v480 = vld [vmem:[%s6 + $0x70] sm:$0xff]
    %v481 = vld [vmem:[%s6 + $0x78] sm:$0xff]
    %v482 = vld [vmem:[#allocation14 + $0x1] sm:$0x7]
    %v483 = vpack.c.bf16 %v465, %v465
    %v485 = vperm.slane %v482, 0
    %v486 = vperm.slane %v482, 1
    %v487 = vperm.slane %v482, 2
    %v504 = vunpack.c.l.b16 %v466
    %v505 = vunpack.c.h.b16 %v466
    %v506 = vunpack.c.l.b16 %v467
    %v507 = vunpack.c.h.b16 %v467
    %v508 = vunpack.c.l.b16 %v468
    %v509 = vunpack.c.h.b16 %v468
    %v510 = vunpack.c.l.b16 %v469
    %v511 = vunpack.c.h.b16 %v469
    %v512 = vunpack.c.l.b16 %v470
    %v513 = vunpack.c.h.b16 %v470
    %v514 = vunpack.c.l.b16 %v471
    %v515 = vunpack.c.h.b16 %v471
    %v516 = vunpack.c.l.b16 %v472
    %v517 = vunpack.c.h.b16 %v472
    %v518 = vunpack.c.l.b16 %v473
    %v519 = vunpack.c.h.b16 %v473
    %v520 = vunpack.c.l.b16 %v474
    %v521 = vunpack.c.h.b16 %v474
    %v522 = vunpack.c.l.b16 %v475
    %v523 = vunpack.c.h.b16 %v475
    %v524 = vunpack.c.l.b16 %v476
    %v525 = vunpack.c.h.b16 %v476
    %v526 = vunpack.c.l.b16 %v477
    %v527 = vunpack.c.h.b16 %v477
    %v528 = vunpack.c.l.b16 %v478
    %v529 = vunpack.c.h.b16 %v478
    %v530 = vunpack.c.l.b16 %v479
    %v531 = vunpack.c.h.b16 %v479
    %v532 = vunpack.c.l.b16 %v480
    %v533 = vunpack.c.h.b16 %v480
    %v534 = vunpack.c.l.b16 %v481
    %v535 = vunpack.c.h.b16 %v481
    %v536 = vpack.c.b16 %v506, %v504
    %v537 = vpack.c.b16 %v507, %v505
    %v538 = vpack.c.b16 %v510, %v508
    %v539 = vpack.c.b16 %v511, %v509
    %v540 = vpack.c.b16 %v514, %v512
    %v541 = vpack.c.b16 %v515, %v513
    %v542 = vpack.c.b16 %v518, %v516
    %v543 = vpack.c.b16 %v519, %v517
    %v544 = vpack.c.b16 %v522, %v520
    %v545 = vpack.c.b16 %v523, %v521
    %v546 = vpack.c.b16 %v526, %v524
    %v547 = vpack.c.b16 %v527, %v525
    %v548 = vpack.c.b16 %v530, %v528
    %v549 = vpack.c.b16 %v531, %v529
    %v550 = vpack.c.b16 %v534, %v532
    %v551 = vpack.c.b16 %v535, %v533
    %568 = vrot.lane.b32.xlu0 %v485, 96
    %v569 = vpop.permute.xlu0 %568
    %570 = vrot.lane.b32.xlu0 %v486, 96
    %v571 = vpop.permute.xlu0 %570
    %572 = vrot.lane.b32.xlu0 %v487, 96
    %v573 = vpop.permute.xlu0 %572
    %v574 = vsel %vm417, %v569, %v571
    %v575 = vsel %vm417, %v571, %v573
    %578 = vmatpush.bf16.msra.mxu0 %v550
    %579 = vmatpush.bf16.msra.mxu0 %v548
    %580 = vmatpush.bf16.msra.mxu0 %v546
    %581 = vmatpush.bf16.msra.mxu0 %v544
    %582 = vmatpush.bf16.msra.mxu0 %v542
    %583 = vmatpush.bf16.msra.mxu0 %v540
    %584 = vmatpush.bf16.msra.mxu0 %v538
    %585 = vmatpush.bf16.msra.mxu0 %v536
    %586 = vmatmul.bf16.gmra.mxu0 %v483
    %v587 = vpop.f32.mrf.mxu0
    %v588 = vadd.f32 %v574, %v587
    %v589 = vpop.f32.mrf.mxu0
    %590 = vdwg.mxu0
    %591 = vmatpush.bf16.msra.mxu0 %v551
    %592 = vmatpush.bf16.msra.mxu0 %v549
    %593 = vmatpush.bf16.msra.mxu0 %v547
    %594 = vmatpush.bf16.msra.mxu0 %v545
    %595 = vmatpush.bf16.msra.mxu0 %v543
    %596 = vmatpush.bf16.msra.mxu0 %v541
    %597 = vmatpush.bf16.msra.mxu0 %v539
    %598 = vmatpush.bf16.msra.mxu0 %v537
    %599 = vmatmul.bf16.gmra.mxu0 %v483
    %v600 = vpop.f32.mrf.mxu0
    %v601 = vadd.f32 %v575, %v600
    %v602 = vpop.f32.mrf.mxu0
    %603 = vdwg.mxu0
    %v604 = vmul.f32 %v588, 0.2
    %v605 = vmul.f32 %v601, 0.2
    %v606 = vmax.f32 %v588, %v604
    %v607 = vmax.f32 %v601, %v605
    %v608 = vrot.slane %v606, 4
    %v609 = vadd.f32 %v606, %v608
    %v610 = vrot.slane %v609, 2
    %v611 = vadd.f32 %v609, %v610
    %v612 = vrot.slane %v611, 1
    %v613 = vadd.f32 %v611, %v612
    %v614 = vrot.slane %v607, 4
    %v615 = vadd.f32 %v607, %v614
    %v616 = vrot.slane %v615, 2
    %v617 = vadd.f32 %v615, %v616
    %v618 = vrot.slane %v617, 1
    %v619 = vadd.f32 %v617, %v618
    %v620 = vmul.f32 %v613, %v306
    %v621 = vmul.f32 %v619, %v306
    %v622 = vsub.f32 %v606, %v620
    %v623 = vsub.f32 %v607, %v621
    %v624 = vmul.f32 %v622, %v622
    %v625 = vmul.f32 %v623, %v623
    %v626 = vrot.slane %v624, 4
    %v627 = vadd.f32 %v624, %v626
    %v628 = vrot.slane %v627, 2
    %v629 = vadd.f32 %v627, %v628
    %v630 = vrot.slane %v629, 1
    %v631 = vadd.f32 %v629, %v630
    %v632 = vrot.slane %v625, 4
    %v633 = vadd.f32 %v625, %v632
    %v634 = vrot.slane %v633, 2
    %v635 = vadd.f32 %v633, %v634
    %v636 = vrot.slane %v635, 1
    %v637 = vadd.f32 %v635, %v636
    %v638 = vmul.f32 %v631, %v306
    %v639 = vmul.f32 %v637, %v306
    %v640 = vadd.f32 %v638, 1e-05
    %v641 = vadd.f32 %v639, 1e-05
    %v642 = vrsqrt.pop %v640
    %v643 = vmul.f32 %v642, %v640
    %v644 = vmul.f32 %v643, %v642
    %v645 = vmul.f32 0.5, %v644
    %v646 = vsub.f32 1.5, %v645
    %v647 = vmul.f32 %v642, %v646
    %vm648 = vweird.f32 %v640
    %vm649 = vweird.f32 %v642
    %vm650 = vmor %vm648, %vm649
    %v651 = vsel %vm650, %v642, %v647
    %v652 = vrsqrt.pop %v641
    %v653 = vmul.f32 %v652, %v641
    %v654 = vmul.f32 %v653, %v652
    %v655 = vmul.f32 0.5, %v654
    %v656 = vsub.f32 1.5, %v655
    %v657 = vmul.f32 %v652, %v656
    %vm658 = vweird.f32 %v641
    %vm659 = vweird.f32 %v652
    %vm660 = vmor %vm658, %vm659
    %v661 = vsel %vm660, %v652, %v657
    %v662 = vmul.f32 %v622, %v651
    %v663 = vmul.f32 %v623, %v661
    %v664 = vld [vmem:[#allocation19] sm:$0xff]
    %v665 = vld [vmem:[#allocation19 + $0x8] sm:$0xff]
    %v666 = vld [vmem:[#allocation19 + $0x10] sm:$0xff]
    %v667 = vld [vmem:[#allocation19 + $0x18] sm:$0xff]
    %v668 = vld [vmem:[#allocation19 + $0x20] sm:$0xff]
    %v669 = vld [vmem:[#allocation19 + $0x28] sm:$0xff]
    %v670 = vld [vmem:[#allocation19 + $0x30] sm:$0xff]
    %v671 = vld [vmem:[#allocation19 + $0x38] sm:$0xff]
    %v672 = vld [vmem:[#allocation19 + $0x40] sm:$0xff]
    %v673 = vld [vmem:[#allocation19 + $0x48] sm:$0xff]
    %v674 = vld [vmem:[#allocation19 + $0x50] sm:$0xff]
    %v675 = vld [vmem:[#allocation19 + $0x58] sm:$0xff]
    %v676 = vld [vmem:[#allocation19 + $0x60] sm:$0xff]
    %v677 = vld [vmem:[#allocation19 + $0x68] sm:$0xff]
    %v678 = vld [vmem:[#allocation19 + $0x70] sm:$0xff]
    %v679 = vld [vmem:[#allocation19 + $0x78] sm:$0xff]
    %v680 = vld [vmem:[#allocation19 + $0x80] sm:$0xff]
    %v681 = vld [vmem:[#allocation19 + $0x88] sm:$0xff]
    %v682 = vld [vmem:[#allocation19 + $0x90] sm:$0xff]
    %v683 = vld [vmem:[#allocation19 + $0x98] sm:$0xff]
    %v684 = vld [vmem:[#allocation19 + $0xa0] sm:$0xff]
    %v685 = vld [vmem:[#allocation19 + $0xa8] sm:$0xff]
    %v686 = vld [vmem:[#allocation19 + $0xb0] sm:$0xff]
    %v687 = vld [vmem:[#allocation19 + $0xb8] sm:$0xff]
    %v688 = vld [vmem:[#allocation19 + $0xc0] sm:$0xff]
    %v689 = vld [vmem:[#allocation19 + $0xc8] sm:$0xff]
    %v690 = vld [vmem:[#allocation19 + $0xd0] sm:$0xff]
    %v691 = vld [vmem:[#allocation19 + $0xd8] sm:$0xff]
    %v692 = vld [vmem:[#allocation19 + $0xe0] sm:$0xff]
    %v693 = vld [vmem:[#allocation19 + $0xe8] sm:$0xff]
    %v694 = vld [vmem:[#allocation19 + $0xf0] sm:$0xff]
    %v695 = vld [vmem:[#allocation19 + $0xf8] sm:$0xff]
    %v696 = vld [vmem:[#allocation14 + $0x3] sm:$0x7]
    %v697 = vpack.c.bf16 %v662, %v662
    %v698 = vpack.c.bf16 %v663, %v663
    %v700 = vperm.slane %v696, 0
    %v701 = vperm.slane %v696, 1
    %v702 = vperm.slane %v696, 2
    %v735 = vunpack.c.l.b16 %v664
    %v736 = vunpack.c.h.b16 %v664
    %v737 = vunpack.c.l.b16 %v665
    %v738 = vunpack.c.h.b16 %v665
    %v739 = vunpack.c.l.b16 %v666
    %v740 = vunpack.c.h.b16 %v666
    %v741 = vunpack.c.l.b16 %v667
    %v742 = vunpack.c.h.b16 %v667
    %v743 = vunpack.c.l.b16 %v668
    %v744 = vunpack.c.h.b16 %v668
    %v745 = vunpack.c.l.b16 %v669
    %v746 = vunpack.c.h.b16 %v669
    %v747 = vunpack.c.l.b16 %v670
    %v748 = vunpack.c.h.b16 %v670
    %v749 = vunpack.c.l.b16 %v671
    %v750 = vunpack.c.h.b16 %v671
    %v751 = vunpack.c.l.b16 %v672
    %v752 = vunpack.c.h.b16 %v672
    %v753 = vunpack.c.l.b16 %v673
    %v754 = vunpack.c.h.b16 %v673
    %v755 = vunpack.c.l.b16 %v674
    %v756 = vunpack.c.h.b16 %v674
    %v757 = vunpack.c.l.b16 %v675
    %v758 = vunpack.c.h.b16 %v675
    %v759 = vunpack.c.l.b16 %v676
    %v760 = vunpack.c.h.b16 %v676
    %v761 = vunpack.c.l.b16 %v677
    %v762 = vunpack.c.h.b16 %v677
    %v763 = vunpack.c.l.b16 %v678
    %v764 = vunpack.c.h.b16 %v678
    %v765 = vunpack.c.l.b16 %v679
    %v766 = vunpack.c.h.b16 %v679
    %v767 = vunpack.c.l.b16 %v680
    %v768 = vunpack.c.h.b16 %v680
    %v769 = vunpack.c.l.b16 %v681
    %v770 = vunpack.c.h.b16 %v681
    %v771 = vunpack.c.l.b16 %v682
    %v772 = vunpack.c.h.b16 %v682
    %v773 = vunpack.c.l.b16 %v683
    %v774 = vunpack.c.h.b16 %v683
    %v775 = vunpack.c.l.b16 %v684
    %v776 = vunpack.c.h.b16 %v684
    %v777 = vunpack.c.l.b16 %v685
    %v778 = vunpack.c.h.b16 %v685
    %v779 = vunpack.c.l.b16 %v686
    %v780 = vunpack.c.h.b16 %v686
    %v781 = vunpack.c.l.b16 %v687
    %v782 = vunpack.c.h.b16 %v687
    %v783 = vunpack.c.l.b16 %v688
    %v784 = vunpack.c.h.b16 %v688
    %v785 = vunpack.c.l.b16 %v689
    %v786 = vunpack.c.h.b16 %v689
    %v787 = vunpack.c.l.b16 %v690
    %v788 = vunpack.c.h.b16 %v690
    %v789 = vunpack.c.l.b16 %v691
    %v790 = vunpack.c.h.b16 %v691
    %v791 = vunpack.c.l.b16 %v692
    %v792 = vunpack.c.h.b16 %v692
    %v793 = vunpack.c.l.b16 %v693
    %v794 = vunpack.c.h.b16 %v693
    %v795 = vunpack.c.l.b16 %v694
    %v796 = vunpack.c.h.b16 %v694
    %v797 = vunpack.c.l.b16 %v695
    %v798 = vunpack.c.h.b16 %v695
    %v799 = vpack.c.b16 %v737, %v735
    %v800 = vpack.c.b16 %v738, %v736
    %v801 = vpack.c.b16 %v741, %v739
    %v802 = vpack.c.b16 %v742, %v740
    %v803 = vpack.c.b16 %v745, %v743
    %v804 = vpack.c.b16 %v746, %v744
    %v805 = vpack.c.b16 %v749, %v747
    %v806 = vpack.c.b16 %v750, %v748
    %v807 = vpack.c.b16 %v753, %v751
    %v808 = vpack.c.b16 %v754, %v752
    %v809 = vpack.c.b16 %v757, %v755
    %v810 = vpack.c.b16 %v758, %v756
    %v811 = vpack.c.b16 %v761, %v759
    %v812 = vpack.c.b16 %v762, %v760
    %v813 = vpack.c.b16 %v765, %v763
    %v814 = vpack.c.b16 %v766, %v764
    %v815 = vpack.c.b16 %v769, %v767
    %v816 = vpack.c.b16 %v770, %v768
    %v817 = vpack.c.b16 %v773, %v771
    %v818 = vpack.c.b16 %v774, %v772
    %v819 = vpack.c.b16 %v777, %v775
    %v820 = vpack.c.b16 %v778, %v776
    %v821 = vpack.c.b16 %v781, %v779
    %v822 = vpack.c.b16 %v782, %v780
    %v823 = vpack.c.b16 %v785, %v783
    %v824 = vpack.c.b16 %v786, %v784
    %v825 = vpack.c.b16 %v789, %v787
    %v826 = vpack.c.b16 %v790, %v788
    %v827 = vpack.c.b16 %v793, %v791
    %v828 = vpack.c.b16 %v794, %v792
    %v829 = vpack.c.b16 %v797, %v795
    %v830 = vpack.c.b16 %v798, %v796
    %863 = vrot.lane.b32.xlu0 %v700, 96
    %v864 = vpop.permute.xlu0 %863
    %865 = vrot.lane.b32.xlu0 %v701, 96
    %v866 = vpop.permute.xlu0 %865
    %867 = vrot.lane.b32.xlu0 %v702, 96
    %v868 = vpop.permute.xlu0 %867
    %v869 = vsel %vm417, %v864, %v866
    %v870 = vsel %vm417, %v866, %v868
    %873 = vmatpush.bf16.msra.mxu0 %v813
    %874 = vmatpush.bf16.msra.mxu0 %v811
    %875 = vmatpush.bf16.msra.mxu0 %v809
    %876 = vmatpush.bf16.msra.mxu0 %v807
    %877 = vmatpush.bf16.msra.mxu0 %v805
    %878 = vmatpush.bf16.msra.mxu0 %v803
    %879 = vmatpush.bf16.msra.mxu0 %v801
    %880 = vmatpush.bf16.msra.mxu0 %v799
    %881 = vmatmul.bf16.gmra.mxu0 %v697
    %v882 = vpop.f32.mrf.mxu0
    %v883 = vadd.f32 %v869, %v882
    %v884 = vpop.f32.mrf.mxu0
    %885 = vdwg.mxu0
    %886 = vmatpush.bf16.msra.mxu0 %v829
    %887 = vmatpush.bf16.msra.mxu0 %v827
    %888 = vmatpush.bf16.msra.mxu0 %v825
    %889 = vmatpush.bf16.msra.mxu0 %v823
    %890 = vmatpush.bf16.msra.mxu0 %v821
    %891 = vmatpush.bf16.msra.mxu0 %v819
    %892 = vmatpush.bf16.msra.mxu0 %v817
    %893 = vmatpush.bf16.msra.mxu0 %v815
    %894 = vmatmul.bf16.gmra.mxu0 %v698
    %v895 = vpop.f32.mrf.mxu0
    %v896 = vadd.f32 %v883, %v895
    %v897 = vpop.f32.mrf.mxu0
    %898 = vdwg.mxu0
    %899 = vmatpush.bf16.msra.mxu0 %v814
    %900 = vmatpush.bf16.msra.mxu0 %v812
    %901 = vmatpush.bf16.msra.mxu0 %v810
    %902 = vmatpush.bf16.msra.mxu0 %v808
    %903 = vmatpush.bf16.msra.mxu0 %v806
    %904 = vmatpush.bf16.msra.mxu0 %v804
    %905 = vmatpush.bf16.msra.mxu0 %v802
    %906 = vmatpush.bf16.msra.mxu0 %v800
    %907 = vmatmul.bf16.gmra.mxu0 %v697
    %v908 = vpop.f32.mrf.mxu0
    %v909 = vadd.f32 %v870, %v908
    %v910 = vpop.f32.mrf.mxu0
    %911 = vdwg.mxu0
    %912 = vmatpush.bf16.msra.mxu0 %v830
    %913 = vmatpush.bf16.msra.mxu0 %v828
    %914 = vmatpush.bf16.msra.mxu0 %v826
    %915 = vmatpush.bf16.msra.mxu0 %v824
    %916 = vmatpush.bf16.msra.mxu0 %v822
    %917 = vmatpush.bf16.msra.mxu0 %v820
    %918 = vmatpush.bf16.msra.mxu0 %v818
    %919 = vmatpush.bf16.msra.mxu0 %v816
    %920 = vmatmul.bf16.gmra.mxu0 %v698
    %v921 = vpop.f32.mrf.mxu0
    %v922 = vadd.f32 %v909, %v921
    %v923 = vpop.f32.mrf.mxu0
    %924 = vdwg.mxu0
    %v925 = vmul.f32 %v896, 0.2
    %v926 = vmul.f32 %v922, 0.2
    %v927 = vmax.f32 %v896, %v925
    %v928 = vmax.f32 %v922, %v926
    %v929 = vrot.slane %v927, 4
    %v930 = vadd.f32 %v927, %v929
    %v931 = vrot.slane %v930, 2
    %v932 = vadd.f32 %v930, %v931
    %v933 = vrot.slane %v932, 1
    %v934 = vadd.f32 %v932, %v933
    %v935 = vrot.slane %v928, 4
    %v936 = vadd.f32 %v928, %v935
    %v937 = vrot.slane %v936, 2
    %v938 = vadd.f32 %v936, %v937
    %v939 = vrot.slane %v938, 1
    %v940 = vadd.f32 %v938, %v939
    %v941 = vmul.f32 %v934, %v306
    %v942 = vmul.f32 %v940, %v306
    %v943 = vsub.f32 %v927, %v941
    %v944 = vsub.f32 %v928, %v942
    %v945 = vmul.f32 %v943, %v943
    %v946 = vmul.f32 %v944, %v944
    %v947 = vrot.slane %v945, 4
    %v948 = vadd.f32 %v945, %v947
    %v949 = vrot.slane %v948, 2
    %v950 = vadd.f32 %v948, %v949
    %v951 = vrot.slane %v950, 1
    %v952 = vadd.f32 %v950, %v951
    %v953 = vrot.slane %v946, 4
    %v954 = vadd.f32 %v946, %v953
    %v955 = vrot.slane %v954, 2
    %v956 = vadd.f32 %v954, %v955
    %v957 = vrot.slane %v956, 1
    %v958 = vadd.f32 %v956, %v957
    %v959 = vmul.f32 %v952, %v306
    %v960 = vmul.f32 %v958, %v306
    %v961 = vadd.f32 %v959, 1e-05
    %v962 = vadd.f32 %v960, 1e-05
    %v963 = vrsqrt.pop %v961
    %v964 = vmul.f32 %v963, %v961
    %v965 = vmul.f32 %v964, %v963
    %v966 = vmul.f32 0.5, %v965
    %v967 = vsub.f32 1.5, %v966
    %v968 = vmul.f32 %v963, %v967
    %vm969 = vweird.f32 %v961
    %vm970 = vweird.f32 %v963
    %vm971 = vmor %vm969, %vm970
    %v972 = vsel %vm971, %v963, %v968
    %v973 = vrsqrt.pop %v962
    %v974 = vmul.f32 %v973, %v962
    %v975 = vmul.f32 %v974, %v973
    %v976 = vmul.f32 0.5, %v975
    %v977 = vsub.f32 1.5, %v976
    %v978 = vmul.f32 %v973, %v977
    %vm979 = vweird.f32 %v962
    %vm980 = vweird.f32 %v973
    %vm981 = vmor %vm979, %vm980
    %v982 = vsel %vm981, %v973, %v978
    %v983 = vmul.f32 %v943, %v972
    %v984 = vmul.f32 %v944, %v982
    %v985 = vld [vmem:[#allocation20] sm:$0xf]
    %v986 = vld [vmem:[#allocation20 + $0x4] sm:$0xf]
    %v987 = vld [vmem:[#allocation20 + $0x8] sm:$0xf]
    %v988 = vld [vmem:[#allocation20 + $0xc] sm:$0xf]
    %v989 = vld [vmem:[#allocation20 + $0x10] sm:$0xf]
    %v990 = vld [vmem:[#allocation20 + $0x14] sm:$0xf]
    %v991 = vld [vmem:[#allocation20 + $0x18] sm:$0xf]
    %v992 = vld [vmem:[#allocation20 + $0x1c] sm:$0xf]
    %v993 = vld [vmem:[#allocation20 + $0x20] sm:$0xf]
    %v994 = vld [vmem:[#allocation20 + $0x24] sm:$0xf]
    %v995 = vld [vmem:[#allocation20 + $0x28] sm:$0xf]
    %v996 = vld [vmem:[#allocation20 + $0x2c] sm:$0xf]
    %v997 = vld [vmem:[#allocation20 + $0x30] sm:$0xf]
    %v998 = vld [vmem:[#allocation20 + $0x34] sm:$0xf]
    %v999 = vld [vmem:[#allocation20 + $0x38] sm:$0xf]
    %v1000 = vld [vmem:[#allocation20 + $0x3c] sm:$0xf]
    %v1001 = vld [vmem:[#allocation20 + $0x40] sm:$0xf]
    %v1002 = vld [vmem:[#allocation20 + $0x44] sm:$0xf]
    %v1003 = vld [vmem:[#allocation20 + $0x48] sm:$0xf]
    %v1004 = vld [vmem:[#allocation20 + $0x4c] sm:$0xf]
    %v1005 = vld [vmem:[#allocation20 + $0x50] sm:$0xf]
    %v1006 = vld [vmem:[#allocation20 + $0x54] sm:$0xf]
    %v1007 = vld [vmem:[#allocation20 + $0x58] sm:$0xf]
    %v1008 = vld [vmem:[#allocation20 + $0x5c] sm:$0xf]
    %v1009 = vld [vmem:[#allocation20 + $0x60] sm:$0xf]
    %v1010 = vld [vmem:[#allocation20 + $0x64] sm:$0xf]
    %v1011 = vld [vmem:[#allocation20 + $0x68] sm:$0xf]
    %v1012 = vld [vmem:[#allocation20 + $0x6c] sm:$0xf]
    %v1013 = vld [vmem:[#allocation20 + $0x70] sm:$0xf]
    %v1014 = vld [vmem:[#allocation20 + $0x74] sm:$0xf]
    %v1015 = vld [vmem:[#allocation20 + $0x78] sm:$0xf]
    %v1016 = vld [vmem:[#allocation20 + $0x7c] sm:$0xf]
    %v1017 = vld [vmem:[#allocation14 + $0x5] sm:$0x3]
    %v1018 = vpack.c.bf16 %v983, %v983
    %v1019 = vpack.c.bf16 %v984, %v984
    %v1021 = vperm.slane %v1017, 0
    %v1022 = vperm.slane %v1017, 1
    %v1055 = vunpack.c.l.b16 %v985
    %v1056 = vunpack.c.l.b16 %v986
    %v1057 = vunpack.c.l.b16 %v987
    %v1058 = vunpack.c.l.b16 %v988
    %v1059 = vunpack.c.l.b16 %v989
    %v1060 = vunpack.c.l.b16 %v990
    %v1061 = vunpack.c.l.b16 %v991
    %v1062 = vunpack.c.l.b16 %v992
    %v1063 = vunpack.c.l.b16 %v993
    %v1064 = vunpack.c.l.b16 %v994
    %v1065 = vunpack.c.l.b16 %v995
    %v1066 = vunpack.c.l.b16 %v996
    %v1067 = vunpack.c.l.b16 %v997
    %v1068 = vunpack.c.l.b16 %v998
    %v1069 = vunpack.c.l.b16 %v999
    %v1070 = vunpack.c.l.b16 %v1000
    %v1071 = vunpack.c.l.b16 %v1001
    %v1072 = vunpack.c.l.b16 %v1002
    %v1073 = vunpack.c.l.b16 %v1003
    %v1074 = vunpack.c.l.b16 %v1004
    %v1075 = vunpack.c.l.b16 %v1005
    %v1076 = vunpack.c.l.b16 %v1006
    %v1077 = vunpack.c.l.b16 %v1007
    %v1078 = vunpack.c.l.b16 %v1008
    %v1079 = vunpack.c.l.b16 %v1009
    %v1080 = vunpack.c.l.b16 %v1010
    %v1081 = vunpack.c.l.b16 %v1011
    %v1082 = vunpack.c.l.b16 %v1012
    %v1083 = vunpack.c.l.b16 %v1013
    %v1084 = vunpack.c.l.b16 %v1014
    %v1085 = vunpack.c.l.b16 %v1015
    %v1086 = vunpack.c.l.b16 %v1016
    %v1087 = vpack.c.b16 %v1056, %v1055
    %v1088 = vpack.c.b16 %v1058, %v1057
    %v1089 = vpack.c.b16 %v1060, %v1059
    %v1090 = vpack.c.b16 %v1062, %v1061
    %v1091 = vpack.c.b16 %v1064, %v1063
    %v1092 = vpack.c.b16 %v1066, %v1065
    %v1093 = vpack.c.b16 %v1068, %v1067
    %v1094 = vpack.c.b16 %v1070, %v1069
    %v1095 = vpack.c.b16 %v1072, %v1071
    %v1096 = vpack.c.b16 %v1074, %v1073
    %v1097 = vpack.c.b16 %v1076, %v1075
    %v1098 = vpack.c.b16 %v1078, %v1077
    %v1099 = vpack.c.b16 %v1080, %v1079
    %v1100 = vpack.c.b16 %v1082, %v1081
    %v1101 = vpack.c.b16 %v1084, %v1083
    %v1102 = vpack.c.b16 %v1086, %v1085
    %1119 = vrot.lane.b32.xlu0 %v1021, 96
    %v1120 = vpop.permute.xlu0 %1119
    %1121 = vrot.lane.b32.xlu0 %v1022, 96
    %v1122 = vpop.permute.xlu0 %1121
    %v1123 = vsel %vm417, %v1120, %v1122
    %1125 = vmatpush.bf16.msra.mxu0 %v1094
    %1126 = vmatpush.bf16.msra.mxu0 %v1093
    %1127 = vmatpush.bf16.msra.mxu0 %v1092
    %1128 = vmatpush.bf16.msra.mxu0 %v1091
    %1129 = vmatpush.bf16.msra.mxu0 %v1090
    %1130 = vmatpush.bf16.msra.mxu0 %v1089
    %1131 = vmatpush.bf16.msra.mxu0 %v1088
    %1132 = vmatpush.bf16.msra.mxu0 %v1087
    %1133 = vmatmul.bf16.gmra.mxu0 %v1018
    %v1134 = vpop.f32.mrf.mxu0
    %v1135 = vadd.f32 %v1123, %v1134
    %v1136 = vpop.f32.mrf.mxu0
    %1137 = vdwg.mxu0
    %1138 = vmatpush.bf16.msra.mxu0 %v1102
    %1139 = vmatpush.bf16.msra.mxu0 %v1101
    %1140 = vmatpush.bf16.msra.mxu0 %v1100
    %1141 = vmatpush.bf16.msra.mxu0 %v1099
    %1142 = vmatpush.bf16.msra.mxu0 %v1098
    %1143 = vmatpush.bf16.msra.mxu0 %v1097
    %1144 = vmatpush.bf16.msra.mxu0 %v1096
    %1145 = vmatpush.bf16.msra.mxu0 %v1095
    %1146 = vmatmul.bf16.gmra.mxu0 %v1019
    %v1147 = vpop.f32.mrf.mxu0
    %v1148 = vadd.f32 %v1135, %v1147
    %v1149 = vpop.f32.mrf.mxu0
    %1150 = vdwg.mxu0
    %v1151 = vmul.f32 %v1148, 0.2
    %v1152 = vmax.f32 %v1148, %v1151
    %v1153 = vld [vmem:[%s9] sm:$0xf]
    %v1154 = vld [vmem:[%s9 + $0x4] sm:$0xf]
    %v1155 = vld [vmem:[%s9 + $0x8] sm:$0xf]
    %v1156 = vld [vmem:[%s9 + $0xc] sm:$0xf]
    %v1157 = vld [vmem:[%s9 + $0x10] sm:$0xf]
    %v1158 = vld [vmem:[%s9 + $0x14] sm:$0xf]
    %v1159 = vld [vmem:[%s9 + $0x18] sm:$0xf]
    %v1160 = vld [vmem:[%s9 + $0x1c] sm:$0xf]
    %v1161 = vld [vmem:[%s9 + $0x20] sm:$0xf]
    %v1162 = vld [vmem:[%s9 + $0x24] sm:$0xf]
    %v1163 = vld [vmem:[%s9 + $0x28] sm:$0xf]
    %v1164 = vld [vmem:[%s9 + $0x2c] sm:$0xf]
    %v1165 = vld [vmem:[%s9 + $0x30] sm:$0xf]
    %v1166 = vld [vmem:[%s9 + $0x34] sm:$0xf]
    %v1167 = vld [vmem:[%s9 + $0x38] sm:$0xf]
    %v1168 = vld [vmem:[%s9 + $0x3c] sm:$0xf]
    %v1169 = vld [vmem:[#allocation14 + $0x6] sm:$0x1]
    %v1170 = vpack.c.bf16 %v1152, %v1152
    %v1172 = vperm.slane %v1169, 0
    %v1189 = vunpack.c.l.b16 %v1153
    %v1190 = vunpack.c.l.b16 %v1154
    %v1191 = vunpack.c.l.b16 %v1155
    %v1192 = vunpack.c.l.b16 %v1156
    %v1193 = vunpack.c.l.b16 %v1157
    %v1194 = vunpack.c.l.b16 %v1158
    %v1195 = vunpack.c.l.b16 %v1159
    %v1196 = vunpack.c.l.b16 %v1160
    %v1197 = vunpack.c.l.b16 %v1161
    %v1198 = vunpack.c.l.b16 %v1162
    %v1199 = vunpack.c.l.b16 %v1163
    %v1200 = vunpack.c.l.b16 %v1164
    %v1201 = vunpack.c.l.b16 %v1165
    %v1202 = vunpack.c.l.b16 %v1166
    %v1203 = vunpack.c.l.b16 %v1167
    %v1204 = vunpack.c.l.b16 %v1168
    %v1205 = vpack.c.b16 %v1190, %v1189
    %v1206 = vpack.c.b16 %v1192, %v1191
    %v1207 = vpack.c.b16 %v1194, %v1193
    %v1208 = vpack.c.b16 %v1196, %v1195
    %v1209 = vpack.c.b16 %v1198, %v1197
    %v1210 = vpack.c.b16 %v1200, %v1199
    %v1211 = vpack.c.b16 %v1202, %v1201
    %v1212 = vpack.c.b16 %v1204, %v1203
    %1221 = vrot.lane.b32.xlu0 %v1172, 96
    %v1222 = vpop.permute.xlu0 %1221
    %1224 = vmatpush.bf16.msra.mxu0 %v1212
    %1225 = vmatpush.bf16.msra.mxu0 %v1211
    %1226 = vmatpush.bf16.msra.mxu0 %v1210
    %1227 = vmatpush.bf16.msra.mxu0 %v1209
    %1228 = vmatpush.bf16.msra.mxu0 %v1208
    %1229 = vmatpush.bf16.msra.mxu0 %v1207
    %1230 = vmatpush.bf16.msra.mxu0 %v1206
    %1231 = vmatpush.bf16.msra.mxu0 %v1205
    %1232 = vmatmul.bf16.gmra.mxu0 %v1170
    %v1233 = vpop.f32.mrf.mxu0
    %v1234 = vadd.f32 %v1222, %v1233
    %v1235 = vpop.f32.mrf.mxu0
    %1236 = vdwg.mxu0
    %v1237 = vld [vmem:[#allocation11] sm:$0xff]
    %v1238 = vmul.f32 %v1234, 0.5
    %v1239 = vmul.f32 %v1238, 1.442695
    %v1240 = vpow.pop %v1239
    %1242 = vrot.lane.b32.xlu0 %v1240, 120
    %v1243 = vpop.permute.xlu0 %1242
    %v1245 = vmul.f32 %v1237, %v1243
    %v1246 = vadd.f32 %v1245, %v1234
    %1247 = vst.msk [vmem:[%s16] sm:$0xff] %vm292, %v1234
    %1249 = vrot.lane.b32.xlu0 %v1246, 16
    %v1250 = vpop.permute.xlu0 %1249
    %vm1252 = vcmask 195712
    %1253 = vst.msk [vmem:[%s16] sm:$0xff] %vm1252, %v1250
    %s1254 = smul.u32 4, 1
    %s1255 = smul.u32 %s1254, 1
    %s1256 = sshll.u32 %s1255, 4
    %1257 = dma.done [#allocation8], %s1256
    %s1258 = smul.u32 4, 8
    %s1259 = smul.u32 %s1258, 2
    %s1260 = sshll.u32 %s1259, 4
    %1261 = dma.done %s172, %s1260
    %s1262 = smul.u32 4, 32
    %s1263 = smul.u32 %s1262, 2
    %s1264 = sshll.u32 %s1263, 4
    %1265 = dma.done %s205, %s1264
    %s1266 = smul.u32 %s1262, 1
    %s1267 = sshll.u32 %s1266, 4
    %1268 = dma.done %s219, %s1267
    %s1269 = smul.u32 4, 16
    %s1270 = smul.u32 %s1269, 1
    %s1271 = sshll.u32 %s1270, 4
    %1272 = dma.done %s233, %s1271
    %s1273 = smul.u32 %s1258, 1
    %s1274 = sshll.u32 %s1273, 4
    %1275 = dma.done %s266, %s1274
    %vm1276 = vcmask 64512
    %v1277 = vsel %vm1276, %v1246, 0.0
    %v1278 = vrot.slane %v1277, 4
    %v1279 = vadd.f32 %v1277, %v1278
    %v1280 = vrot.slane %v1279, 2
    %v1281 = vadd.f32 %v1279, %v1280
    %v1282 = vrot.slane %v1281, 1
    %v1283 = vadd.f32 %v1281, %v1282
    %v1284 = vmul.f32 %v1283, %v306
    %v1285 = vsub.f32 %v1246, %v1284
    %v1286 = vmul.f32 %v1285, %v1285
    %v1287 = vsel %vm1276, %v1286, 0.0
    %v1288 = vrot.slane %v1287, 4
    %v1289 = vadd.f32 %v1287, %v1288
    %v1290 = vrot.slane %v1289, 2
    %v1291 = vadd.f32 %v1289, %v1290
    %v1292 = vrot.slane %v1291, 1
    %v1293 = vadd.f32 %v1291, %v1292
    %v1294 = vmul.f32 %v1293, %v306
    %v1295 = vadd.f32 %v1294, 1e-05
    %v1296 = vrsqrt.pop %v1295
    %v1297 = vmul.f32 %v1296, %v1295
    %v1298 = vmul.f32 %v1297, %v1296
    %v1299 = vmul.f32 0.5, %v1298
    %v1300 = vsub.f32 1.5, %v1299
    %v1301 = vmul.f32 %v1296, %v1300
    %vm1302 = vweird.f32 %v1295
    %vm1303 = vweird.f32 %v1296
    %vm1304 = vmor %vm1302, %vm1303
    %v1305 = vsel %vm1304, %v1296, %v1301
    %v1306 = vmul.f32 %v1285, %v1305
    %v1307 = vld [vmem:[#allocation2] sm:$0xf]
    %v1308 = vld [vmem:[#allocation14 + $0x6] sm:$0x1]
    %v1309 = vpack.c.bf16 %v1306, %v1306
    %v1311 = vperm.slane %v1308, 0
    %1312 = vrot.lane.b32.xlu0 %v1311, 80
    %v1313 = vpop.permute.xlu0 %1312
    %v1316 = vsel %vm1276, %v1309, 0
    %vm1318 = vcmask 1043456
    %v1320 = vsel %vm1318, %v1307, 0
    %1322 = vmatpush.bf16.msra.mxu0 0
    %1323 = vmatpush.bf16.msra.mxu0 0
    %1324 = vmatpush.bf16.msra.mxu0 0
    %1325 = vmatpush.bf16.msra.mxu0 0
    %1326 = vmatpush.bf16.msra.mxu0 0
    %1327 = vmatpush.bf16.msra.mxu0 0
    %1328 = vmatpush.bf16.msra.mxu0 0
    %1329 = vmatpush.bf16.msra.mxu0 %v1320
    %1330 = vmatmul.bf16.gmra.mxu0 %v1316
    %v1331 = vpop.f32.mrf.mxu0
    %v1332 = vadd.f32 %v1313, %v1331
    %v1333 = vpop.f32.mrf.mxu0
    %1334 = vdwg.mxu0
    %v1335 = vmul.f32 %v1332, 0.2
    %v1336 = vmax.f32 %v1332, %v1335
    %vm1337 = vcmask 523264
    %v1338 = vsel %vm1337, %v1336, 0.0
    %v1339 = vrot.slane %v1338, 4
    %v1340 = vadd.f32 %v1338, %v1339
    %v1341 = vrot.slane %v1340, 2
    %v1342 = vadd.f32 %v1340, %v1341
    %v1343 = vrot.slane %v1342, 1
    %v1344 = vadd.f32 %v1342, %v1343
    %v1345 = vmul.f32 %v1344, %v306
    %v1346 = vsub.f32 %v1336, %v1345
    %v1347 = vmul.f32 %v1346, %v1346
    %v1348 = vsel %vm1337, %v1347, 0.0
    %v1349 = vrot.slane %v1348, 4
    %v1350 = vadd.f32 %v1348, %v1349
    %v1351 = vrot.slane %v1350, 2
    %v1352 = vadd.f32 %v1350, %v1351
    %v1353 = vrot.slane %v1352, 1
    %v1354 = vadd.f32 %v1352, %v1353
    %v1355 = vmul.f32 %v1354, %v306
    %v1356 = vadd.f32 %v1355, 1e-05
    %v1357 = vrsqrt.pop %v1356
    %v1358 = vmul.f32 %v1357, %v1356
    %v1359 = vmul.f32 %v1358, %v1357
    %v1360 = vmul.f32 0.5, %v1359
    %v1361 = vsub.f32 1.5, %v1360
    %v1362 = vmul.f32 %v1357, %v1361
    %vm1363 = vweird.f32 %v1356
    %vm1364 = vweird.f32 %v1357
    %vm1365 = vmor %vm1363, %vm1364
    %v1366 = vsel %vm1365, %v1357, %v1362
    %v1367 = vmul.f32 %v1346, %v1366
    %v1368 = vld [vmem:[#allocation3] sm:$0xff]
    %v1369 = vld [vmem:[#allocation3 + $0x8] sm:$0xff]
    %v1370 = vld [vmem:[#allocation3 + $0x10] sm:$0xff]
    %v1371 = vld [vmem:[#allocation3 + $0x18] sm:$0xff]
    %v1372 = vld [vmem:[#allocation3 + $0x20] sm:$0xff]
    %v1373 = vld [vmem:[#allocation3 + $0x28] sm:$0xff]
    %v1374 = vld [vmem:[#allocation3 + $0x30] sm:$0xff]
    %v1375 = vld [vmem:[#allocation3 + $0x38] sm:$0xff]
    %v1376 = vld [vmem:[#allocation14 + $0x6] sm:$0x7]
    %v1377 = vpack.c.bf16 %v1367, %v1367
    %v1379 = vperm.slane %v1376, 0
    %v1380 = vperm.slane %v1376, 1
    %v1381 = vperm.slane %v1376, 2
    %v1390 = vunpack.c.l.b16 %v1368
    %v1391 = vunpack.c.h.b16 %v1368
    %v1392 = vunpack.c.l.b16 %v1369
    %v1393 = vunpack.c.h.b16 %v1369
    %v1394 = vunpack.c.l.b16 %v1370
    %v1395 = vunpack.c.h.b16 %v1370
    %v1396 = vunpack.c.l.b16 %v1371
    %v1397 = vunpack.c.h.b16 %v1371
    %v1398 = vunpack.c.l.b16 %v1372
    %v1399 = vunpack.c.h.b16 %v1372
    %v1400 = vunpack.c.l.b16 %v1373
    %v1401 = vunpack.c.h.b16 %v1373
    %v1402 = vunpack.c.l.b16 %v1374
    %v1403 = vunpack.c.h.b16 %v1374
    %v1404 = vunpack.c.l.b16 %v1375
    %v1405 = vunpack.c.h.b16 %v1375
    %v1406 = vpack.c.b16 %v1392, %v1390
    %v1407 = vpack.c.b16 %v1393, %v1391
    %v1408 = vpack.c.b16 %v1396, %v1394
    %v1409 = vpack.c.b16 %v1397, %v1395
    %v1410 = vpack.c.b16 %v1400, %v1398
    %v1411 = vpack.c.b16 %v1401, %v1399
    %v1412 = vpack.c.b16 %v1404, %v1402
    %v1413 = vpack.c.b16 %v1405, %v1403
    %1422 = vrot.lane.b32.xlu0 %v1379, 16
    %v1423 = vpop.permute.xlu0 %1422
    %1424 = vrot.lane.b32.xlu0 %v1380, 16
    %v1425 = vpop.permute.xlu0 %1424
    %1426 = vrot.lane.b32.xlu0 %v1381, 16
    %v1427 = vpop.permute.xlu0 %1426
    %v1428 = vsel %vm292, %v1423, %v1425
    %v1429 = vsel %vm292, %v1425, %v1427
    %v1433 = vsel %vm1337, %v1377, 0
    %1435 = vmatpush.bf16.msra.mxu0 0
    %1436 = vmatpush.bf16.msra.mxu0 0
    %1437 = vmatpush.bf16.msra.mxu0 0
    %1438 = vmatpush.bf16.msra.mxu0 0
    %1439 = vmatpush.bf16.msra.mxu0 %v1412
    %1440 = vmatpush.bf16.msra.mxu0 %v1410
    %1441 = vmatpush.bf16.msra.mxu0 %v1408
    %1442 = vmatpush.bf16.msra.mxu0 %v1406
    %1443 = vmatmul.bf16.gmra.mxu0 %v1433
    %v1444 = vpop.f32.mrf.mxu0
    %v1445 = vadd.f32 %v1428, %v1444
    %v1446 = vpop.f32.mrf.mxu0
    %1447 = vdwg.mxu0
    %1448 = vmatpush.bf16.msra.mxu0 0
    %1449 = vmatpush.bf16.msra.mxu0 0
    %1450 = vmatpush.bf16.msra.mxu0 0
    %1451 = vmatpush.bf16.msra.mxu0 0
    %1452 = vmatpush.bf16.msra.mxu0 %v1413
    %1453 = vmatpush.bf16.msra.mxu0 %v1411
    %1454 = vmatpush.bf16.msra.mxu0 %v1409
    %1455 = vmatpush.bf16.msra.mxu0 %v1407
    %1456 = vmatmul.bf16.gmra.mxu0 %v1433
    %v1457 = vpop.f32.mrf.mxu0
    %v1458 = vadd.f32 %v1429, %v1457
    %v1459 = vpop.f32.mrf.mxu0
    %1460 = vdwg.mxu0
    %v1461 = vmul.f32 %v1445, 0.2
    %v1462 = vmul.f32 %v1458, 0.2
    %v1463 = vmax.f32 %v1445, %v1461
    %v1464 = vmax.f32 %v1458, %v1462
    %v1465 = vrot.slane %v1463, 4
    %v1466 = vadd.f32 %v1463, %v1465
    %v1467 = vrot.slane %v1466, 2
    %v1468 = vadd.f32 %v1466, %v1467
    %v1469 = vrot.slane %v1468, 1
    %v1470 = vadd.f32 %v1468, %v1469
    %v1471 = vrot.slane %v1464, 4
    %v1472 = vadd.f32 %v1464, %v1471
    %v1473 = vrot.slane %v1472, 2
    %v1474 = vadd.f32 %v1472, %v1473
    %v1475 = vrot.slane %v1474, 1
    %v1476 = vadd.f32 %v1474, %v1475
    %v1477 = vmul.f32 %v1470, %v306
    %v1478 = vmul.f32 %v1476, %v306
    %v1479 = vsub.f32 %v1463, %v1477
    %v1480 = vsub.f32 %v1464, %v1478
    %v1481 = vmul.f32 %v1479, %v1479
    %v1482 = vmul.f32 %v1480, %v1480
    %v1483 = vrot.slane %v1481, 4
    %v1484 = vadd.f32 %v1481, %v1483
    %v1485 = vrot.slane %v1484, 2
    %v1486 = vadd.f32 %v1484, %v1485
    %v1487 = vrot.slane %v1486, 1
    %v1488 = vadd.f32 %v1486, %v1487
    %v1489 = vrot.slane %v1482, 4
    %v1490 = vadd.f32 %v1482, %v1489
    %v1491 = vrot.slane %v1490, 2
    %v1492 = vadd.f32 %v1490, %v1491
    %v1493 = vrot.slane %v1492, 1
    %v1494 = vadd.f32 %v1492, %v1493
    %v1495 = vmul.f32 %v1488, %v306
    %v1496 = vmul.f32 %v1494, %v306
    %v1497 = vadd.f32 %v1495, 1e-05
    %v1498 = vadd.f32 %v1496, 1e-05
    %v1499 = vrsqrt.pop %v1497
    %v1500 = vmul.f32 %v1499, %v1497
    %v1501 = vmul.f32 %v1500, %v1499
    %v1502 = vmul.f32 0.5, %v1501
    %v1503 = vsub.f32 1.5, %v1502
    %v1504 = vmul.f32 %v1499, %v1503
    %vm1505 = vweird.f32 %v1497
    %vm1506 = vweird.f32 %v1499
    %vm1507 = vmor %vm1505, %vm1506
    %v1508 = vsel %vm1507, %v1499, %v1504
    %v1509 = vrsqrt.pop %v1498
    %v1510 = vmul.f32 %v1509, %v1498
    %v1511 = vmul.f32 %v1510, %v1509
    %v1512 = vmul.f32 0.5, %v1511
    %v1513 = vsub.f32 1.5, %v1512
    %v1514 = vmul.f32 %v1509, %v1513
    %vm1515 = vweird.f32 %v1498
    %vm1516 = vweird.f32 %v1509
    %vm1517 = vmor %vm1515, %vm1516
    %v1518 = vsel %vm1517, %v1509, %v1514
    %v1519 = vmul.f32 %v1479, %v1508
    %v1520 = vmul.f32 %v1480, %v1518
    %v1521 = vld [vmem:[#allocation4] sm:$0xff]
    %v1522 = vld [vmem:[#allocation4 + $0x8] sm:$0xff]
    %v1523 = vld [vmem:[#allocation4 + $0x10] sm:$0xff]
    %v1524 = vld [vmem:[#allocation4 + $0x18] sm:$0xff]
    %v1525 = vld [vmem:[#allocation4 + $0x20] sm:$0xff]
    %v1526 = vld [vmem:[#allocation4 + $0x28] sm:$0xff]
    %v1527 = vld [vmem:[#allocation4 + $0x30] sm:$0xff]
    %v1528 = vld [vmem:[#allocation4 + $0x38] sm:$0xff]
    %v1529 = vld [vmem:[#allocation4 + $0x40] sm:$0xff]
    %v1530 = vld [vmem:[#allocation4 + $0x48] sm:$0xff]
    %v1531 = vld [vmem:[#allocation4 + $0x50] sm:$0xff]
    %v1532 = vld [vmem:[#allocation4 + $0x58] sm:$0xff]
    %v1533 = vld [vmem:[#allocation4 + $0x60] sm:$0xff]
    %v1534 = vld [vmem:[#allocation4 + $0x68] sm:$0xff]
    %v1535 = vld [vmem:[#allocation4 + $0x70] sm:$0xff]
    %v1536 = vld [vmem:[#allocation4 + $0x78] sm:$0xff]
    %v1537 = vld [vmem:[#allocation4 + $0x80] sm:$0xff]
    %v1538 = vld [vmem:[#allocation4 + $0x88] sm:$0xff]
    %v1539 = vld [vmem:[#allocation4 + $0x90] sm:$0xff]
    %v1540 = vld [vmem:[#allocation4 + $0x98] sm:$0xff]
    %v1541 = vld [vmem:[#allocation4 + $0xa0] sm:$0xff]
    %v1542 = vld [vmem:[#allocation4 + $0xa8] sm:$0xff]
    %v1543 = vld [vmem:[#allocation4 + $0xb0] sm:$0xff]
    %v1544 = vld [vmem:[#allocation4 + $0xb8] sm:$0xff]
    %v1545 = vld [vmem:[#allocation4 + $0xc0] sm:$0xff]
    %v1546 = vld [vmem:[#allocation4 + $0xc8] sm:$0xff]
    %v1547 = vld [vmem:[#allocation4 + $0xd0] sm:$0xff]
    %v1548 = vld [vmem:[#allocation4 + $0xd8] sm:$0xff]
    %v1549 = vld [vmem:[#allocation4 + $0xe0] sm:$0xff]
    %v1550 = vld [vmem:[#allocation4 + $0xe8] sm:$0xff]
    %v1551 = vld [vmem:[#allocation4 + $0xf0] sm:$0xff]
    %v1552 = vld [vmem:[#allocation4 + $0xf8] sm:$0xff]
    %v1553 = vld [vmem:[#allocation14 + $0x8] sm:$0x7]
    %v1554 = vpack.c.bf16 %v1519, %v1519
    %v1555 = vpack.c.bf16 %v1520, %v1520
    %v1557 = vperm.slane %v1553, 0
    %v1558 = vperm.slane %v1553, 1
    %v1559 = vperm.slane %v1553, 2
    %v1592 = vunpack.c.l.b16 %v1521
    %v1593 = vunpack.c.h.b16 %v1521
    %v1594 = vunpack.c.l.b16 %v1522
    %v1595 = vunpack.c.h.b16 %v1522
    %v1596 = vunpack.c.l.b16 %v1523
    %v1597 = vunpack.c.h.b16 %v1523
    %v1598 = vunpack.c.l.b16 %v1524
    %v1599 = vunpack.c.h.b16 %v1524
    %v1600 = vunpack.c.l.b16 %v1525
    %v1601 = vunpack.c.h.b16 %v1525
    %v1602 = vunpack.c.l.b16 %v1526
    %v1603 = vunpack.c.h.b16 %v1526
    %v1604 = vunpack.c.l.b16 %v1527
    %v1605 = vunpack.c.h.b16 %v1527
    %v1606 = vunpack.c.l.b16 %v1528
    %v1607 = vunpack.c.h.b16 %v1528
    %v1608 = vunpack.c.l.b16 %v1529
    %v1609 = vunpack.c.h.b16 %v1529
    %v1610 = vunpack.c.l.b16 %v1530
    %v1611 = vunpack.c.h.b16 %v1530
    %v1612 = vunpack.c.l.b16 %v1531
    %v1613 = vunpack.c.h.b16 %v1531
    %v1614 = vunpack.c.l.b16 %v1532
    %v1615 = vunpack.c.h.b16 %v1532
    %v1616 = vunpack.c.l.b16 %v1533
    %v1617 = vunpack.c.h.b16 %v1533
    %v1618 = vunpack.c.l.b16 %v1534
    %v1619 = vunpack.c.h.b16 %v1534
    %v1620 = vunpack.c.l.b16 %v1535
    %v1621 = vunpack.c.h.b16 %v1535
    %v1622 = vunpack.c.l.b16 %v1536
    %v1623 = vunpack.c.h.b16 %v1536
    %v1624 = vunpack.c.l.b16 %v1537
    %v1625 = vunpack.c.h.b16 %v1537
    %v1626 = vunpack.c.l.b16 %v1538
    %v1627 = vunpack.c.h.b16 %v1538
    %v1628 = vunpack.c.l.b16 %v1539
    %v1629 = vunpack.c.h.b16 %v1539
    %v1630 = vunpack.c.l.b16 %v1540
    %v1631 = vunpack.c.h.b16 %v1540
    %v1632 = vunpack.c.l.b16 %v1541
    %v1633 = vunpack.c.h.b16 %v1541
    %v1634 = vunpack.c.l.b16 %v1542
    %v1635 = vunpack.c.h.b16 %v1542
    %v1636 = vunpack.c.l.b16 %v1543
    %v1637 = vunpack.c.h.b16 %v1543
    %v1638 = vunpack.c.l.b16 %v1544
    %v1639 = vunpack.c.h.b16 %v1544
    %v1640 = vunpack.c.l.b16 %v1545
    %v1641 = vunpack.c.h.b16 %v1545
    %v1642 = vunpack.c.l.b16 %v1546
    %v1643 = vunpack.c.h.b16 %v1546
    %v1644 = vunpack.c.l.b16 %v1547
    %v1645 = vunpack.c.h.b16 %v1547
    %v1646 = vunpack.c.l.b16 %v1548
    %v1647 = vunpack.c.h.b16 %v1548
    %v1648 = vunpack.c.l.b16 %v1549
    %v1649 = vunpack.c.h.b16 %v1549
    %v1650 = vunpack.c.l.b16 %v1550
    %v1651 = vunpack.c.h.b16 %v1550
    %v1652 = vunpack.c.l.b16 %v1551
    %v1653 = vunpack.c.h.b16 %v1551
    %v1654 = vunpack.c.l.b16 %v1552
    %v1655 = vunpack.c.h.b16 %v1552
    %v1656 = vpack.c.b16 %v1594, %v1592
    %v1657 = vpack.c.b16 %v1595, %v1593
    %v1658 = vpack.c.b16 %v1598, %v1596
    %v1659 = vpack.c.b16 %v1599, %v1597
    %v1660 = vpack.c.b16 %v1602, %v1600
    %v1661 = vpack.c.b16 %v1603, %v1601
    %v1662 = vpack.c.b16 %v1606, %v1604
    %v1663 = vpack.c.b16 %v1607, %v1605
    %v1664 = vpack.c.b16 %v1610, %v1608
    %v1665 = vpack.c.b16 %v1611, %v1609
    %v1666 = vpack.c.b16 %v1614, %v1612
    %v1667 = vpack.c.b16 %v1615, %v1613
    %v1668 = vpack.c.b16 %v1618, %v1616
    %v1669 = vpack.c.b16 %v1619, %v1617
    %v1670 = vpack.c.b16 %v1622, %v1620
    %v1671 = vpack.c.b16 %v1623, %v1621
    %v1672 = vpack.c.b16 %v1626, %v1624
    %v1673 = vpack.c.b16 %v1627, %v1625
    %v1674 = vpack.c.b16 %v1630, %v1628
    %v1675 = vpack.c.b16 %v1631, %v1629
    %v1676 = vpack.c.b16 %v1634, %v1632
    %v1677 = vpack.c.b16 %v1635, %v1633
    %v1678 = vpack.c.b16 %v1638, %v1636
    %v1679 = vpack.c.b16 %v1639, %v1637
    %v1680 = vpack.c.b16 %v1642, %v1640
    %v1681 = vpack.c.b16 %v1643, %v1641
    %v1682 = vpack.c.b16 %v1646, %v1644
    %v1683 = vpack.c.b16 %v1647, %v1645
    %v1684 = vpack.c.b16 %v1650, %v1648
    %v1685 = vpack.c.b16 %v1651, %v1649
    %v1686 = vpack.c.b16 %v1654, %v1652
    %v1687 = vpack.c.b16 %v1655, %v1653
    %1720 = vrot.lane.b32.xlu0 %v1557, 16
    %v1721 = vpop.permute.xlu0 %1720
    %1722 = vrot.lane.b32.xlu0 %v1558, 16
    %v1723 = vpop.permute.xlu0 %1722
    %1724 = vrot.lane.b32.xlu0 %v1559, 16
    %v1725 = vpop.permute.xlu0 %1724
    %v1726 = vsel %vm292, %v1721, %v1723
    %v1727 = vsel %vm292, %v1723, %v1725
    %1730 = vmatpush.bf16.msra.mxu0 %v1670
    %1731 = vmatpush.bf16.msra.mxu0 %v1668
    %1732 = vmatpush.bf16.msra.mxu0 %v1666
    %1733 = vmatpush.bf16.msra.mxu0 %v1664
    %1734 = vmatpush.bf16.msra.mxu0 %v1662
    %1735 = vmatpush.bf16.msra.mxu0 %v1660
    %1736 = vmatpush.bf16.msra.mxu0 %v1658
    %1737 = vmatpush.bf16.msra.mxu0 %v1656
    %1738 = vmatmul.bf16.gmra.mxu0 %v1554
    %v1739 = vpop.f32.mrf.mxu0
    %v1740 = vadd.f32 %v1726, %v1739
    %v1741 = vpop.f32.mrf.mxu0
    %1742 = vdwg.mxu0
    %1743 = vmatpush.bf16.msra.mxu0 %v1686
    %1744 = vmatpush.bf16.msra.mxu0 %v1684
    %1745 = vmatpush.bf16.msra.mxu0 %v1682
    %1746 = vmatpush.bf16.msra.mxu0 %v1680
    %1747 = vmatpush.bf16.msra.mxu0 %v1678
    %1748 = vmatpush.bf16.msra.mxu0 %v1676
    %1749 = vmatpush.bf16.msra.mxu0 %v1674
    %1750 = vmatpush.bf16.msra.mxu0 %v1672
    %1751 = vmatmul.bf16.gmra.mxu0 %v1555
    %v1752 = vpop.f32.mrf.mxu0
    %v1753 = vadd.f32 %v1740, %v1752
    %v1754 = vpop.f32.mrf.mxu0
    %1755 = vdwg.mxu0
    %1756 = vmatpush.bf16.msra.mxu0 %v1671
    %1757 = vmatpush.bf16.msra.mxu0 %v1669
    %1758 = vmatpush.bf16.msra.mxu0 %v1667
    %1759 = vmatpush.bf16.msra.mxu0 %v1665
    %1760 = vmatpush.bf16.msra.mxu0 %v1663
    %1761 = vmatpush.bf16.msra.mxu0 %v1661
    %1762 = vmatpush.bf16.msra.mxu0 %v1659
    %1763 = vmatpush.bf16.msra.mxu0 %v1657
    %1764 = vmatmul.bf16.gmra.mxu0 %v1554
    %v1765 = vpop.f32.mrf.mxu0
    %v1766 = vadd.f32 %v1727, %v1765
    %v1767 = vpop.f32.mrf.mxu0
    %1768 = vdwg.mxu0
    %1769 = vmatpush.bf16.msra.mxu0 %v1687
    %1770 = vmatpush.bf16.msra.mxu0 %v1685
    %1771 = vmatpush.bf16.msra.mxu0 %v1683
    %1772 = vmatpush.bf16.msra.mxu0 %v1681
    %1773 = vmatpush.bf16.msra.mxu0 %v1679
    %1774 = vmatpush.bf16.msra.mxu0 %v1677
    %1775 = vmatpush.bf16.msra.mxu0 %v1675
    %1776 = vmatpush.bf16.msra.mxu0 %v1673
    %1777 = vmatmul.bf16.gmra.mxu0 %v1555
    %v1778 = vpop.f32.mrf.mxu0
    %v1779 = vadd.f32 %v1766, %v1778
    %v1780 = vpop.f32.mrf.mxu0
    %1781 = vdwg.mxu0
    %v1782 = vmul.f32 %v1753, 0.2
    %v1783 = vmul.f32 %v1779, 0.2
    %v1784 = vmax.f32 %v1753, %v1782
    %v1785 = vmax.f32 %v1779, %v1783
    %v1786 = vrot.slane %v1784, 4
    %v1787 = vadd.f32 %v1784, %v1786
    %v1788 = vrot.slane %v1787, 2
    %v1789 = vadd.f32 %v1787, %v1788
    %v1790 = vrot.slane %v1789, 1
    %v1791 = vadd.f32 %v1789, %v1790
    %v1792 = vrot.slane %v1785, 4
    %v1793 = vadd.f32 %v1785, %v1792
    %v1794 = vrot.slane %v1793, 2
    %v1795 = vadd.f32 %v1793, %v1794
    %v1796 = vrot.slane %v1795, 1
    %v1797 = vadd.f32 %v1795, %v1796
    %v1798 = vmul.f32 %v1791, %v306
    %v1799 = vmul.f32 %v1797, %v306
    %v1800 = vsub.f32 %v1784, %v1798
    %v1801 = vsub.f32 %v1785, %v1799
    %v1802 = vmul.f32 %v1800, %v1800
    %v1803 = vmul.f32 %v1801, %v1801
    %v1804 = vrot.slane %v1802, 4
    %v1805 = vadd.f32 %v1802, %v1804
    %v1806 = vrot.slane %v1805, 2
    %v1807 = vadd.f32 %v1805, %v1806
    %v1808 = vrot.slane %v1807, 1
    %v1809 = vadd.f32 %v1807, %v1808
    %v1810 = vrot.slane %v1803, 4
    %v1811 = vadd.f32 %v1803, %v1810
    %v1812 = vrot.slane %v1811, 2
    %v1813 = vadd.f32 %v1811, %v1812
    %v1814 = vrot.slane %v1813, 1
    %v1815 = vadd.f32 %v1813, %v1814
    %v1816 = vmul.f32 %v1809, %v306
    %v1817 = vmul.f32 %v1815, %v306
    %v1818 = vadd.f32 %v1816, 1e-05
    %v1819 = vadd.f32 %v1817, 1e-05
    %v1820 = vrsqrt.pop %v1818
    %v1821 = vmul.f32 %v1820, %v1818
    %v1822 = vmul.f32 %v1821, %v1820
    %v1823 = vmul.f32 0.5, %v1822
    %v1824 = vsub.f32 1.5, %v1823
    %v1825 = vmul.f32 %v1820, %v1824
    %vm1826 = vweird.f32 %v1818
    %vm1827 = vweird.f32 %v1820
    %vm1828 = vmor %vm1826, %vm1827
    %v1829 = vsel %vm1828, %v1820, %v1825
    %v1830 = vrsqrt.pop %v1819
    %v1831 = vmul.f32 %v1830, %v1819
    %v1832 = vmul.f32 %v1831, %v1830
    %v1833 = vmul.f32 0.5, %v1832
    %v1834 = vsub.f32 1.5, %v1833
    %v1835 = vmul.f32 %v1830, %v1834
    %vm1836 = vweird.f32 %v1819
    %vm1837 = vweird.f32 %v1830
    %vm1838 = vmor %vm1836, %vm1837
    %v1839 = vsel %vm1838, %v1830, %v1835
    %v1840 = vmul.f32 %v1800, %v1829
    %v1841 = vmul.f32 %v1801, %v1839
    %v1842 = vld [vmem:[#allocation5] sm:$0xf]
    %v1843 = vld [vmem:[#allocation5 + $0x4] sm:$0xf]
    %v1844 = vld [vmem:[#allocation5 + $0x8] sm:$0xf]
    %v1845 = vld [vmem:[#allocation5 + $0xc] sm:$0xf]
    %v1846 = vld [vmem:[#allocation5 + $0x10] sm:$0xf]
    %v1847 = vld [vmem:[#allocation5 + $0x14] sm:$0xf]
    %v1848 = vld [vmem:[#allocation5 + $0x18] sm:$0xf]
    %v1849 = vld [vmem:[#allocation5 + $0x1c] sm:$0xf]
    %v1850 = vld [vmem:[#allocation5 + $0x20] sm:$0xf]
    %v1851 = vld [vmem:[#allocation5 + $0x24] sm:$0xf]
    %v1852 = vld [vmem:[#allocation5 + $0x28] sm:$0xf]
    %v1853 = vld [vmem:[#allocation5 + $0x2c] sm:$0xf]
    %v1854 = vld [vmem:[#allocation5 + $0x30] sm:$0xf]
    %v1855 = vld [vmem:[#allocation5 + $0x34] sm:$0xf]
    %v1856 = vld [vmem:[#allocation5 + $0x38] sm:$0xf]
    %v1857 = vld [vmem:[#allocation5 + $0x3c] sm:$0xf]
    %v1858 = vld [vmem:[#allocation5 + $0x40] sm:$0xf]
    %v1859 = vld [vmem:[#allocation5 + $0x44] sm:$0xf]
    %v1860 = vld [vmem:[#allocation5 + $0x48] sm:$0xf]
    %v1861 = vld [vmem:[#allocation5 + $0x4c] sm:$0xf]
    %v1862 = vld [vmem:[#allocation5 + $0x50] sm:$0xf]
    %v1863 = vld [vmem:[#allocation5 + $0x54] sm:$0xf]
    %v1864 = vld [vmem:[#allocation5 + $0x58] sm:$0xf]
    %v1865 = vld [vmem:[#allocation5 + $0x5c] sm:$0xf]
    %v1866 = vld [vmem:[#allocation5 + $0x60] sm:$0xf]
    %v1867 = vld [vmem:[#allocation5 + $0x64] sm:$0xf]
    %v1868 = vld [vmem:[#allocation5 + $0x68] sm:$0xf]
    %v1869 = vld [vmem:[#allocation5 + $0x6c] sm:$0xf]
    %v1870 = vld [vmem:[#allocation5 + $0x70] sm:$0xf]
    %v1871 = vld [vmem:[#allocation5 + $0x74] sm:$0xf]
    %v1872 = vld [vmem:[#allocation5 + $0x78] sm:$0xf]
    %v1873 = vld [vmem:[#allocation5 + $0x7c] sm:$0xf]
    %v1874 = vld [vmem:[#allocation14 + $0xa] sm:$0x3]
    %v1875 = vpack.c.bf16 %v1840, %v1840
    %v1876 = vpack.c.bf16 %v1841, %v1841
    %v1878 = vperm.slane %v1874, 0
    %v1879 = vperm.slane %v1874, 1
    %v1912 = vunpack.c.l.b16 %v1842
    %v1913 = vunpack.c.l.b16 %v1843
    %v1914 = vunpack.c.l.b16 %v1844
    %v1915 = vunpack.c.l.b16 %v1845
    %v1916 = vunpack.c.l.b16 %v1846
    %v1917 = vunpack.c.l.b16 %v1847
    %v1918 = vunpack.c.l.b16 %v1848
    %v1919 = vunpack.c.l.b16 %v1849
    %v1920 = vunpack.c.l.b16 %v1850
    %v1921 = vunpack.c.l.b16 %v1851
    %v1922 = vunpack.c.l.b16 %v1852
    %v1923 = vunpack.c.l.b16 %v1853
    %v1924 = vunpack.c.l.b16 %v1854
    %v1925 = vunpack.c.l.b16 %v1855
    %v1926 = vunpack.c.l.b16 %v1856
    %v1927 = vunpack.c.l.b16 %v1857
    %v1928 = vunpack.c.l.b16 %v1858
    %v1929 = vunpack.c.l.b16 %v1859
    %v1930 = vunpack.c.l.b16 %v1860
    %v1931 = vunpack.c.l.b16 %v1861
    %v1932 = vunpack.c.l.b16 %v1862
    %v1933 = vunpack.c.l.b16 %v1863
    %v1934 = vunpack.c.l.b16 %v1864
    %v1935 = vunpack.c.l.b16 %v1865
    %v1936 = vunpack.c.l.b16 %v1866
    %v1937 = vunpack.c.l.b16 %v1867
    %v1938 = vunpack.c.l.b16 %v1868
    %v1939 = vunpack.c.l.b16 %v1869
    %v1940 = vunpack.c.l.b16 %v1870
    %v1941 = vunpack.c.l.b16 %v1871
    %v1942 = vunpack.c.l.b16 %v1872
    %v1943 = vunpack.c.l.b16 %v1873
    %v1944 = vpack.c.b16 %v1913, %v1912
    %v1945 = vpack.c.b16 %v1915, %v1914
    %v1946 = vpack.c.b16 %v1917, %v1916
    %v1947 = vpack.c.b16 %v1919, %v1918
    %v1948 = vpack.c.b16 %v1921, %v1920
    %v1949 = vpack.c.b16 %v1923, %v1922
    %v1950 = vpack.c.b16 %v1925, %v1924
    %v1951 = vpack.c.b16 %v1927, %v1926
    %v1952 = vpack.c.b16 %v1929, %v1928
    %v1953 = vpack.c.b16 %v1931, %v1930
    %v1954 = vpack.c.b16 %v1933, %v1932
    %v1955 = vpack.c.b16 %v1935, %v1934
    %v1956 = vpack.c.b16 %v1937, %v1936
    %v1957 = vpack.c.b16 %v1939, %v1938
    %v1958 = vpack.c.b16 %v1941, %v1940
    %v1959 = vpack.c.b16 %v1943, %v1942
    %1976 = vrot.lane.b32.xlu0 %v1878, 16
    %v1977 = vpop.permute.xlu0 %1976
    %1978 = vrot.lane.b32.xlu0 %v1879, 16
    %v1979 = vpop.permute.xlu0 %1978
    %v1980 = vsel %vm292, %v1977, %v1979
    %1982 = vmatpush.bf16.msra.mxu0 %v1951
    %1983 = vmatpush.bf16.msra.mxu0 %v1950
    %1984 = vmatpush.bf16.msra.mxu0 %v1949
    %1985 = vmatpush.bf16.msra.mxu0 %v1948
    %1986 = vmatpush.bf16.msra.mxu0 %v1947
    %1987 = vmatpush.bf16.msra.mxu0 %v1946
    %1988 = vmatpush.bf16.msra.mxu0 %v1945
    %1989 = vmatpush.bf16.msra.mxu0 %v1944
    %1990 = vmatmul.bf16.gmra.mxu0 %v1875
    %v1991 = vpop.f32.mrf.mxu0
    %v1992 = vadd.f32 %v1980, %v1991
    %v1993 = vpop.f32.mrf.mxu0
    %1994 = vdwg.mxu0
    %1995 = vmatpush.bf16.msra.mxu0 %v1959
    %1996 = vmatpush.bf16.msra.mxu0 %v1958
    %1997 = vmatpush.bf16.msra.mxu0 %v1957
    %1998 = vmatpush.bf16.msra.mxu0 %v1956
    %1999 = vmatpush.bf16.msra.mxu0 %v1955
    %2000 = vmatpush.bf16.msra.mxu0 %v1954
    %2001 = vmatpush.bf16.msra.mxu0 %v1953
    %2002 = vmatpush.bf16.msra.mxu0 %v1952
    %2003 = vmatmul.bf16.gmra.mxu0 %v1876
    %v2004 = vpop.f32.mrf.mxu0
    %v2005 = vadd.f32 %v1992, %v2004
    %v2006 = vpop.f32.mrf.mxu0
    %2007 = vdwg.mxu0
    %v2008 = vmul.f32 %v2005, 0.2
    %v2009 = vmax.f32 %v2005, %v2008
    %v2010 = vrot.slane %v2009, 4
    %v2011 = vadd.f32 %v2009, %v2010
    %v2012 = vrot.slane %v2011, 2
    %v2013 = vadd.f32 %v2011, %v2012
    %v2014 = vrot.slane %v2013, 1
    %v2015 = vadd.f32 %v2013, %v2014
    %v2016 = vmul.f32 %v2015, %v306
    %v2017 = vsub.f32 %v2009, %v2016
    %v2018 = vmul.f32 %v2017, %v2017
    %v2019 = vrot.slane %v2018, 4
    %v2020 = vadd.f32 %v2018, %v2019
    %v2021 = vrot.slane %v2020, 2
    %v2022 = vadd.f32 %v2020, %v2021
    %v2023 = vrot.slane %v2022, 1
    %v2024 = vadd.f32 %v2022, %v2023
    %v2025 = vmul.f32 %v2024, %v306
    %v2026 = vadd.f32 %v2025, 1e-05
    %v2027 = vrsqrt.pop %v2026
    %v2028 = vmul.f32 %v2027, %v2026
    %v2029 = vmul.f32 %v2028, %v2027
    %v2030 = vmul.f32 0.5, %v2029
    %v2031 = vsub.f32 1.5, %v2030
    %v2032 = vmul.f32 %v2027, %v2031
    %vm2033 = vweird.f32 %v2026
    %vm2034 = vweird.f32 %v2027
    %vm2035 = vmor %vm2033, %vm2034
    %v2036 = vsel %vm2035, %v2027, %v2032
    %v2037 = vmul.f32 %v2017, %v2036
    %v2038 = vld [vmem:[#allocation6] sm:$0xf]
    %v2039 = vld [vmem:[#allocation6 + $0x4] sm:$0xf]
    %v2040 = vld [vmem:[#allocation6 + $0x8] sm:$0xf]
    %v2041 = vld [vmem:[#allocation6 + $0xc] sm:$0xf]
    %v2042 = vld [vmem:[#allocation6 + $0x10] sm:$0xf]
    %v2043 = vld [vmem:[#allocation6 + $0x14] sm:$0xf]
    %v2044 = vld [vmem:[#allocation6 + $0x18] sm:$0xf]
    %v2045 = vld [vmem:[#allocation6 + $0x1c] sm:$0xf]
    %v2046 = vld [vmem:[#allocation6 + $0x20] sm:$0xf]
    %v2047 = vld [vmem:[#allocation6 + $0x24] sm:$0xf]
    %v2048 = vld [vmem:[#allocation6 + $0x28] sm:$0xf]
    %v2049 = vld [vmem:[#allocation6 + $0x2c] sm:$0xf]
    %v2050 = vld [vmem:[#allocation6 + $0x30] sm:$0xf]
    %v2051 = vld [vmem:[#allocation6 + $0x34] sm:$0xf]
    %v2052 = vld [vmem:[#allocation6 + $0x38] sm:$0xf]
    %v2053 = vld [vmem:[#allocation6 + $0x3c] sm:$0xf]
    %v2054 = vld [vmem:[#allocation14 + $0xb] sm:$0x3]
    %v2055 = vpack.c.bf16 %v2037, %v2037
    %v2057 = vperm.slane %v2054, 0
    %v2058 = vperm.slane %v2054, 1
    %v2075 = vunpack.c.l.b16 %v2038
    %v2076 = vunpack.c.l.b16 %v2039
    %v2077 = vunpack.c.l.b16 %v2040
    %v2078 = vunpack.c.l.b16 %v2041
    %v2079 = vunpack.c.l.b16 %v2042
    %v2080 = vunpack.c.l.b16 %v2043
    %v2081 = vunpack.c.l.b16 %v2044
    %v2082 = vunpack.c.l.b16 %v2045
    %v2083 = vunpack.c.l.b16 %v2046
    %v2084 = vunpack.c.l.b16 %v2047
    %v2085 = vunpack.c.l.b16 %v2048
    %v2086 = vunpack.c.l.b16 %v2049
    %v2087 = vunpack.c.l.b16 %v2050
    %v2088 = vunpack.c.l.b16 %v2051
    %v2089 = vunpack.c.l.b16 %v2052
    %v2090 = vunpack.c.l.b16 %v2053
    %v2091 = vpack.c.b16 %v2076, %v2075
    %v2092 = vpack.c.b16 %v2078, %v2077
    %v2093 = vpack.c.b16 %v2080, %v2079
    %v2094 = vpack.c.b16 %v2082, %v2081
    %v2095 = vpack.c.b16 %v2084, %v2083
    %v2096 = vpack.c.b16 %v2086, %v2085
    %v2097 = vpack.c.b16 %v2088, %v2087
    %v2098 = vpack.c.b16 %v2090, %v2089
    %2107 = vrot.lane.b32.xlu0 %v2057, 16
    %v2108 = vpop.permute.xlu0 %2107
    %2109 = vrot.lane.b32.xlu0 %v2058, 16
    %v2110 = vpop.permute.xlu0 %2109
    %v2111 = vsel %vm292, %v2108, %v2110
    %2113 = vmatpush.bf16.msra.mxu0 %v2098
    %2114 = vmatpush.bf16.msra.mxu0 %v2097
    %2115 = vmatpush.bf16.msra.mxu0 %v2096
    %2116 = vmatpush.bf16.msra.mxu0 %v2095
    %2117 = vmatpush.bf16.msra.mxu0 %v2094
    %2118 = vmatpush.bf16.msra.mxu0 %v2093
    %2119 = vmatpush.bf16.msra.mxu0 %v2092
    %2120 = vmatpush.bf16.msra.mxu0 %v2091
    %2121 = vmatmul.bf16.gmra.mxu0 %v2055
    %v2122 = vpop.f32.mrf.mxu0
    %v2123 = vadd.f32 %v2111, %v2122
    %v2124 = vpop.f32.mrf.mxu0
    %2125 = vdwg.mxu0
    %v2126 = vmul.f32 %v2123, 0.2
    %v2127 = vmax.f32 %v2123, %v2126
    %v2128 = vld [vmem:[#allocation7] sm:$0xf]
    %v2129 = vld [vmem:[#allocation7 + $0x4] sm:$0xf]
    %v2130 = vld [vmem:[#allocation7 + $0x8] sm:$0xf]
    %v2131 = vld [vmem:[#allocation7 + $0xc] sm:$0xf]
    %v2132 = vld [vmem:[#allocation7 + $0x10] sm:$0xf]
    %v2133 = vld [vmem:[#allocation7 + $0x14] sm:$0xf]
    %v2134 = vld [vmem:[#allocation7 + $0x18] sm:$0xf]
    %v2135 = vld [vmem:[#allocation7 + $0x1c] sm:$0xf]
    %v2136 = vld [vmem:[#allocation14 + $0xc] sm:$0x1]
    %v2137 = vpack.c.bf16 %v2127, %v2127
    %v2139 = vperm.slane %v2136, 0
    %v2148 = vunpack.c.l.b16 %v2128
    %v2149 = vunpack.c.l.b16 %v2129
    %v2150 = vunpack.c.l.b16 %v2130
    %v2151 = vunpack.c.l.b16 %v2131
    %v2152 = vunpack.c.l.b16 %v2132
    %v2153 = vunpack.c.l.b16 %v2133
    %v2154 = vunpack.c.l.b16 %v2134
    %v2155 = vunpack.c.l.b16 %v2135
    %v2156 = vpack.c.b16 %v2149, %v2148
    %v2157 = vpack.c.b16 %v2151, %v2150
    %v2158 = vpack.c.b16 %v2153, %v2152
    %v2159 = vpack.c.b16 %v2155, %v2154
    %2164 = vrot.lane.b32.xlu0 %v2139, 80
    %v2165 = vpop.permute.xlu0 %2164
    %v2168 = vsel %vm1337, %v2137, 0
    %2170 = vmatpush.bf16.msra.mxu0 0
    %2171 = vmatpush.bf16.msra.mxu0 0
    %2172 = vmatpush.bf16.msra.mxu0 0
    %2173 = vmatpush.bf16.msra.mxu0 0
    %2174 = vmatpush.bf16.msra.mxu0 %v2159
    %2175 = vmatpush.bf16.msra.mxu0 %v2158
    %2176 = vmatpush.bf16.msra.mxu0 %v2157
    %2177 = vmatpush.bf16.msra.mxu0 %v2156
    %2178 = vmatmul.bf16.gmra.mxu0 %v2168
    %v2179 = vpop.f32.mrf.mxu0
    %v2180 = vadd.f32 %v2165, %v2179
    %v2181 = vpop.f32.mrf.mxu0
    %2182 = vdwg.mxu0
    %v2183 = vld [vmem:[#allocation13] sm:$0xff]
    %v2184 = vmul.f32 %v2180, 0.5
    %v2185 = vmul.f32 %v2184, 1.442695
    %v2186 = vpow.pop %v2185
    %2188 = vrot.lane.b32.xlu0 %v2186, 112
    %v2189 = vpop.permute.xlu0 %2188
    %v2191 = vmul.f32 %v2183, %v2189
    %v2192 = vadd.f32 %v2191, %v2180
    %2194 = vrot.lane.b32.xlu0 %v2192, 24
    %v2195 = vpop.permute.xlu0 %2194
    %vm2197 = vcmask 326848
    %2198 = vst.msk [vmem:[%s16] sm:$0xff] %vm2197, %v2195
    // Predicated region
    $region143: #{vae_forward.1} parent=1 // pred_check
      _
    $region144: #{vae_forward.1} parent=1 // pred_check_branch
      %2200 = sbr.rel (0) target = $region146
    $region145: #{vae_forward.1} parent=1 // pred_region
      _
    $region146: #{vae_forward.1} parent=1 // pred_fallthru
      _
    // Predicated region
    $region147: #{vae_forward.1} parent=1 // pred_check
      _
    $region148: #{vae_forward.1} parent=1 // pred_check_branch
      %2202 = sbr.rel (0) target = $region150
    $region149: #{vae_forward.1} parent=1 // pred_region
      _
    $region150: #{vae_forward.1} parent=1 // pred_fallthru
      _
    %2203 = vsyncpa [#allocation10], 1
    %2204 = vsyncpa [#allocation12], 1
    %2205 = vsyncpa [#allocation15], 1
    %2206 = vsyncpa [#allocation18], 1
    %2207 = vsyncpa [#allocation21], 1
  %2208 = vsyncmov [#allocation8]
  %s2209 = vpop.sfrf %2208
  %p2210 = scmp.eq.s32.totalorder %s2209, 0
  %p2211 = pneg %p2210
  %2213 = shalt.err (%p2211)
  %s2214 = scalar_lea.sflag [#allocation8], 1
  %2215 = vsyncmov %s2214
  %s2216 = vpop.sfrf %2215
  %p2217 = scmp.eq.s32.totalorder %s2216, 0
  %p2218 = pneg %p2217
  %2220 = shalt.err (%p2218)
  %s2221 = scalar_lea.sflag [#allocation8], 2
  %2222 = vsyncmov %s2221
  %s2223 = vpop.sfrf %2222
  %p2224 = scmp.eq.s32.totalorder %s2223, 0
  %p2225 = pneg %p2224
  %2227 = shalt.err (%p2225)
  %s2228 = scalar_lea.sflag [#allocation8], 3
  %2229 = vsyncmov %s2228
  %s2230 = vpop.sfrf %2229
  %p2231 = scmp.eq.s32.totalorder %s2230, 0
  %p2232 = pneg %p2231
  %2234 = shalt.err (%p2232)
  %s2235 = scalar_lea.sflag [#allocation8], 4
  %2236 = vsyncmov %s2235
  %s2237 = vpop.sfrf %2236
  %p2238 = scmp.eq.s32.totalorder %s2237, 0
  %p2239 = pneg %p2238
  %2241 = shalt.err (%p2239)
  %s2242 = scalar_lea.sflag [#allocation8], 5
  %2243 = vsyncmov %s2242
  %s2244 = vpop.sfrf %2243
  %p2245 = scmp.eq.s32.totalorder %s2244, 0
  %p2246 = pneg %p2245
  %2248 = shalt.err (%p2246)

</llo_original>
